<compile_context>
chip_gen: v6e
topology: v6e:2x2x1
jax: 0.10.0
libtpu: 0.0.40
codegen_flags: <defaults>
</compile_context>

<pallas_src>
import jax
import jax.numpy as jnp
from jax.experimental import pallas as pl
from jax.experimental.pallas import tpu as pltpu


def _softplus(v):
    # Identical math to log(exp(v) + 1); stable for large |v|.
    return jnp.maximum(v, 0.0) + jnp.log1p(jnp.exp(-jnp.abs(v)))


def _mlp_kernel(x_ref, w1_ref, b1_ref, w2_ref, b2_ref, w3_ref, b3_ref, o_ref):
    x = x_ref[...]                                       # (tile_b, in_dim)

    # Layer 1: (tile_b, in) @ (in, hid) on the MXU (K=2 pad is free here).
    h1 = _softplus(
        jnp.dot(x, w1_ref[...], preferred_element_type=jnp.float32) + b1_ref[...])

    # Layer 2: (tile_b, hid) @ (hid, hid).
    h2 = _softplus(
        jnp.dot(h1, w2_ref[...], preferred_element_type=jnp.float32) + b2_ref[...])

    # Output layer: (tile_b, hid) @ (hid, out).
    out = jnp.dot(h2, w3_ref[...], preferred_element_type=jnp.float32) + b3_ref[...]
    o_ref[...] = out.astype(o_ref.dtype)


def _num_tensorcores():
    """Best-effort TensorCore count per device (2 on v7x, else 1)."""
    try:
        d = jax.devices()[0]
        nc = getattr(d, "num_cores", None)
        if isinstance(nc, int) and nc > 0:
            return nc
        kind = str(getattr(d, "device_kind", "")).lower()
        if "v7" in kind or "7x" in kind:
            return 2
    except Exception:
        pass
    return 1


def net_forward(x, params, *, tile_b=None, max_tile_b=2048):
    """Forward pass of Net: softplus(L1(x)) -> softplus(L2(.)) -> L3(.).

    x: (B, input_size) float32
    params: w1 (in,h), b1 (1,h), w2 (h,h), b2 (1,h), w3 (h,out), b3 (1,out)
            (Linear weights pre-transposed to (in, out) so y = x @ W + b.)
    """
    w1, b1 = params["w1"], params["b1"]
    w2, b2 = params["w2"], params["b2"]
    w3, b3 = params["w3"], params["b3"]

    B, in_dim = x.shape
    hid = w1.shape[1]
    out_size = w3.shape[1]

    # Grid sizing: one tile per TensorCore when the batch fits, capped at
    # max_tile_b rows per tile.  Always a multiple of 8 (sublane alignment).
    if tile_b is None:
        n_tc = _num_tensorcores()
        tile_b = -(-B // n_tc)            # cdiv(B, n_tc)
    tile_b = min(tile_b, max_tile_b)
    tile_b = max(8, ((tile_b + 7) // 8) * 8)

    b_pad = ((B + tile_b - 1) // tile_b) * tile_b
    if b_pad != B:
        x = jnp.pad(x, ((0, b_pad - B), (0, 0)))

    grid = (b_pad // tile_b,)
    const = lambda i: (0, 0)              # weights resident in VMEM across steps

    out = pl.pallas_call(
        _mlp_kernel,
        out_shape=jax.ShapeDtypeStruct((b_pad, out_size), x.dtype),
        grid=grid,
        in_specs=[
            pl.BlockSpec((tile_b, in_dim), lambda i: (i, 0)),   # activations stream
            pl.BlockSpec((in_dim, hid), const),                 # w1
            pl.BlockSpec((1, hid), const),                      # b1
            pl.BlockSpec((hid, hid), const),                    # w2
            pl.BlockSpec((1, hid), const),                      # b2
            pl.BlockSpec((hid, out_size), const),               # w3
            pl.BlockSpec((1, out_size), const),                 # b3
        ],
        out_specs=pl.BlockSpec((tile_b, out_size), lambda i: (i, 0)),
        compiler_params=pltpu.CompilerParams(
            dimension_semantics=("parallel",)),                 # shards grid on v7x
    )(x, w1, b1, w2, b2, w3, b3)

    if b_pad != B:
        out = out[:B]
    return out


def init_params(key, input_size, hidden_size, output_size):
    """Deterministic init mimicking nn.Linear's uniform(-1/sqrt(fan_in), ...)."""
    ks = jax.random.split(key, 6)

    def linear(kw, kb, fan_in, fan_out):
        bound = 1.0 / jnp.sqrt(jnp.float32(fan_in))
        w = jax.random.uniform(kw, (fan_in, fan_out), jnp.float32, -bound, bound)
        b = jax.random.uniform(kb, (1, fan_out), jnp.float32, -bound, bound)
        return w, b

    w1, b1 = linear(ks[0], ks[1], input_size, hidden_size)
    w2, b2 = linear(ks[2], ks[3], hidden_size, hidden_size)
    w3, b3 = linear(ks[4], ks[5], hidden_size, output_size)
    return {"w1": w1, "b1": b1, "w2": w2, "b2": b2, "w3": w3, "b3": b3}


def _reference(x, p):
    # Matches the PyTorch module's softplus(x) = log(exp(x) + 1).
    sp = lambda v: jnp.log(jnp.exp(v) + 1.0)
    h1 = sp(x @ p["w1"] + p["b1"])
    h2 = sp(h1 @ p["w2"] + p["b2"])
    return h2 @ p["w3"] + p["b3"]


if __name__ == "__main__":
    # 2-dim Lotka-Volterra config: input=2, hidden=32, output=2.
    # Batch of 256 trajectory states, fused into one pallas_call whose grid
    # is 1 tile per TensorCore (grid=(1,) on v5e/v6e, (2,) on v7x).
    input_size, hidden_size, output_size = 2, 32, 2
    batch = 256

    key = jax.random.PRNGKey(0)
    kx, kp = jax.random.split(key)
    x = jax.random.normal(kx, (batch, input_size), jnp.float32)
    params = init_params(kp, input_size, hidden_size, output_size)

    out = net_forward(x, params)
    out = jax.block_until_ready(out)

    ref = _reference(x, params)
    assert out.shape == (batch, output_size)
    assert jnp.allclose(out, ref, atol=1e-5, rtol=1e-5)

    print("KERNEL_OK")
</pallas_src>

<mosaic_0001>
module attributes {stable_mosaic.version = 11 : i64} {
  func.func @_mlp_kernel(%arg0: i32, %arg1: memref<256x2xf32, #tpu.memory_space<vmem>>, %arg2: memref<2x32xf32, #tpu.memory_space<vmem>>, %arg3: memref<1x32xf32, #tpu.memory_space<vmem>>, %arg4: memref<32x32xf32, #tpu.memory_space<vmem>>, %arg5: memref<1x32xf32, #tpu.memory_space<vmem>>, %arg6: memref<32x2xf32, #tpu.memory_space<vmem>>, %arg7: memref<1x2xf32, #tpu.memory_space<vmem>>, %arg8: memref<256x2xf32, #tpu.memory_space<vmem>>) attributes {dimension_semantics = [#tpu.dimension_semantics<parallel>], iteration_bounds = array<i64: 1>, scalar_prefetch = 0 : i64, scratch_operands = 0 : i64, tpu.core_type = #tpu.core_type<tc>, window_params = [{transform_indices = @transform_0, window_bounds = array<i64: 256, 2>}, {pipeline_mode = #tpu.pipeline_mode<synchronous>, transform_indices = @transform_1, window_bounds = array<i64: 2, 32>}, {pipeline_mode = #tpu.pipeline_mode<synchronous>, transform_indices = @transform_2, window_bounds = array<i64: 1, 32>}, {pipeline_mode = #tpu.pipeline_mode<synchronous>, transform_indices = @transform_3, window_bounds = array<i64: 32, 32>}, {pipeline_mode = #tpu.pipeline_mode<synchronous>, transform_indices = @transform_4, window_bounds = array<i64: 1, 32>}, {pipeline_mode = #tpu.pipeline_mode<synchronous>, transform_indices = @transform_5, window_bounds = array<i64: 32, 2>}, {pipeline_mode = #tpu.pipeline_mode<synchronous>, transform_indices = @transform_6, window_bounds = array<i64: 1, 2>}, {transform_indices = @transform_7, window_bounds = array<i64: 256, 2>}]} {
    %c0 = arith.constant 0 : index
    %c0_0 = arith.constant 0 : index
    %0 = vector.load %arg1[%c0, %c0_0] : memref<256x2xf32, #tpu.memory_space<vmem>>, vector<256x2xf32>
    %c0_1 = arith.constant 0 : index
    %c0_2 = arith.constant 0 : index
    %1 = vector.load %arg2[%c0_1, %c0_2] : memref<2x32xf32, #tpu.memory_space<vmem>>, vector<2x32xf32>
    %cst = arith.constant dense<0.000000e+00> : vector<256x32xf32>
    %2 = tpu.matmul %0, %1, %cst {dimension_numbers = #tpu.dot_dimension_numbers<[1], [0], [0], [1], [0, 0, 1, 1], [], []>} : vector<256x2xf32>, vector<2x32xf32>, vector<256x32xf32> -> vector<256x32xf32>
    %c0_3 = arith.constant 0 : index
    %c0_4 = arith.constant 0 : index
    %3 = vector.load %arg3[%c0_3, %c0_4] : memref<1x32xf32, #tpu.memory_space<vmem>>, vector<1x32xf32>
    %4 = vector.broadcast %3 : vector<1x32xf32> to vector<256x32xf32>
    %5 = arith.addf %2, %4 : vector<256x32xf32>
    %cst_5 = arith.constant 0.000000e+00 : f32
    %6 = vector.broadcast %cst_5 : f32 to vector<256x32xf32>
    %7 = arith.maximumf %5, %6 : vector<256x32xf32>
    %8 = math.absf %5 : vector<256x32xf32>
    %cst_6 = arith.constant 0.000000e+00 : f32
    %9 = vector.broadcast %cst_6 : f32 to vector<256x32xf32>
    %10 = arith.subf %9, %8 : vector<256x32xf32>
    %11 = math.exp %10 : vector<256x32xf32>
    %12 = math.log1p %11 : vector<256x32xf32>
    %13 = arith.addf %7, %12 : vector<256x32xf32>
    %c0_7 = arith.constant 0 : index
    %c0_8 = arith.constant 0 : index
    %14 = vector.load %arg4[%c0_7, %c0_8] : memref<32x32xf32, #tpu.memory_space<vmem>>, vector<32x32xf32>
    %cst_9 = arith.constant dense<0.000000e+00> : vector<256x32xf32>
    %15 = tpu.matmul %13, %14, %cst_9 {dimension_numbers = #tpu.dot_dimension_numbers<[1], [0], [0], [1], [0, 0, 1, 1], [], []>} : vector<256x32xf32>, vector<32x32xf32>, vector<256x32xf32> -> vector<256x32xf32>
    %c0_10 = arith.constant 0 : index
    %c0_11 = arith.constant 0 : index
    %16 = vector.load %arg5[%c0_10, %c0_11] : memref<1x32xf32, #tpu.memory_space<vmem>>, vector<1x32xf32>
    %17 = vector.broadcast %16 : vector<1x32xf32> to vector<256x32xf32>
    %18 = arith.addf %15, %17 : vector<256x32xf32>
    %cst_12 = arith.constant 0.000000e+00 : f32
    %19 = vector.broadcast %cst_12 : f32 to vector<256x32xf32>
    %20 = arith.maximumf %18, %19 : vector<256x32xf32>
    %21 = math.absf %18 : vector<256x32xf32>
    %cst_13 = arith.constant 0.000000e+00 : f32
    %22 = vector.broadcast %cst_13 : f32 to vector<256x32xf32>
    %23 = arith.subf %22, %21 : vector<256x32xf32>
    %24 = math.exp %23 : vector<256x32xf32>
    %25 = math.log1p %24 : vector<256x32xf32>
    %26 = arith.addf %20, %25 : vector<256x32xf32>
    %c0_14 = arith.constant 0 : index
    %c0_15 = arith.constant 0 : index
    %27 = vector.load %arg6[%c0_14, %c0_15] : memref<32x2xf32, #tpu.memory_space<vmem>>, vector<32x2xf32>
    %cst_16 = arith.constant dense<0.000000e+00> : vector<256x2xf32>
    %28 = tpu.matmul %26, %27, %cst_16 {dimension_numbers = #tpu.dot_dimension_numbers<[1], [0], [0], [1], [0, 0, 1, 1], [], []>} : vector<256x32xf32>, vector<32x2xf32>, vector<256x2xf32> -> vector<256x2xf32>
    %c0_17 = arith.constant 0 : index
    %c0_18 = arith.constant 0 : index
    %29 = vector.load %arg7[%c0_17, %c0_18] : memref<1x2xf32, #tpu.memory_space<vmem>>, vector<1x2xf32>
    %30 = vector.broadcast %29 : vector<1x2xf32> to vector<256x2xf32>
    %31 = arith.addf %28, %30 : vector<256x2xf32>
    %c0_19 = arith.constant 0 : index
    %c0_20 = arith.constant 0 : index
    %32 = vector.load %arg8[%c0_19, %c0_20] : memref<256x2xf32, #tpu.memory_space<vmem>>, vector<256x2xf32>
    tpu.vector_store %arg8[%c0_19, %c0_20], %31 {strides = array<i32>} : memref<256x2xf32, #tpu.memory_space<vmem>>, vector<256x2xf32>,
    return
  }
  func.func @transform_0(%arg0: i32) -> (i32, i32) {
    %c0_i32 = arith.constant 0 : i32
    %c0_i32_0 = arith.constant 0 : i32
    return %arg0, %c0_i32 : i32, i32
  }
  func.func @transform_1(%arg0: i32) -> (i32, i32) {
    %c0_i32 = arith.constant 0 : i32
    %c0_i32_0 = arith.constant 0 : i32
    %c0_i32_1 = arith.constant 0 : i32
    return %c0_i32, %c0_i32_0 : i32, i32
  }
  func.func @transform_2(%arg0: i32) -> (i32, i32) {
    %c0_i32 = arith.constant 0 : i32
    %c0_i32_0 = arith.constant 0 : i32
    %c0_i32_1 = arith.constant 0 : i32
    return %c0_i32, %c0_i32_0 : i32, i32
  }
  func.func @transform_3(%arg0: i32) -> (i32, i32) {
    %c0_i32 = arith.constant 0 : i32
    %c0_i32_0 = arith.constant 0 : i32
    %c0_i32_1 = arith.constant 0 : i32
    return %c0_i32, %c0_i32_0 : i32, i32
  }
  func.func @transform_4(%arg0: i32) -> (i32, i32) {
    %c0_i32 = arith.constant 0 : i32
    %c0_i32_0 = arith.constant 0 : i32
    %c0_i32_1 = arith.constant 0 : i32
    return %c0_i32, %c0_i32_0 : i32, i32
  }
  func.func @transform_5(%arg0: i32) -> (i32, i32) {
    %c0_i32 = arith.constant 0 : i32
    %c0_i32_0 = arith.constant 0 : i32
    %c0_i32_1 = arith.constant 0 : i32
    return %c0_i32, %c0_i32_0 : i32, i32
  }
  func.func @transform_6(%arg0: i32) -> (i32, i32) {
    %c0_i32 = arith.constant 0 : i32
    %c0_i32_0 = arith.constant 0 : i32
    %c0_i32_1 = arith.constant 0 : i32
    return %c0_i32, %c0_i32_0 : i32, i32
  }
  func.func @transform_7(%arg0: i32) -> (i32, i32) {
    %c0_i32 = arith.constant 0 : i32
    %c0_i32_0 = arith.constant 0 : i32
    return %arg0, %c0_i32 : i32, i32
  }
}

</mosaic_0001>

<llo_original>
// kernel: tpu_custom_call.1
$region0: #{tpu_custom_call.1}
  #allocation0 [shape = 'u32[]', space=smem, size = 0x4, offset = 0x4, fixed_abs, tag = 'smem constant byte address 0x4 - core index']
  #allocation1 [shape = 'u32[144,128]{1,0:T(1,128)}', space=vmem, size = 0x12000, scoped, tag = 'internal scratch']
  %s0 = inlined_call_operand.vmem [shape: f32[256,2], index: 0, kind: input, shape index: {}]
  %s1 = inlined_call_operand.vmem [shape: f32[2,32], index: 1, kind: input, shape index: {}]
  %s2 = inlined_call_operand.vmem [shape: f32[1,32], index: 2, kind: input, shape index: {}]
  %s3 = inlined_call_operand.vmem [shape: f32[32,32], index: 3, kind: input, shape index: {}]
  %s4 = inlined_call_operand.vmem [shape: f32[1,32], index: 4, kind: input, shape index: {}]
  %s5 = inlined_call_operand.vmem [shape: f32[32,2], index: 5, kind: input, shape index: {}]
  %s6 = inlined_call_operand.vmem [shape: f32[1,2], index: 6, kind: input, shape index: {}]
  %s7 = inlined_call_operand.vmem [shape: f32[256,2], index: 7, kind: output, shape index: {}]
  %s8 = sld [smem:[#allocation0]]
  $region38: #{tpu_custom_call.1} parent=0
    _
  %s10 = ssub.s32 1, %s8
  %s11 = scalar_select 0, %s10, %s8
  // Predicated region
  $region2: #{tpu_custom_call.1} parent=0 // pred_check
    _
  $region3: #{tpu_custom_call.1} parent=0 // pred_check_branch
    %13 = sbr.rel (0) target = $region5
  $region4: #{tpu_custom_call.1} parent=0 // pred_region
    _
  $region5: #{tpu_custom_call.1} parent=0 // pred_fallthru
    _
  // Predicated region
  $region6: #{tpu_custom_call.1} parent=0 // pred_check
    _
  $region7: #{tpu_custom_call.1} parent=0 // pred_check_branch
    %15 = sbr.rel (0) target = $region9
  $region8: #{tpu_custom_call.1} parent=0 // pred_region
    _
  $region9: #{tpu_custom_call.1} parent=0 // pred_fallthru
    _
  // Predicated region
  $region10: #{tpu_custom_call.1} parent=0 // pred_check
    _
  $region11: #{tpu_custom_call.1} parent=0 // pred_check_branch
    %17 = sbr.rel (0) target = $region13
  $region12: #{tpu_custom_call.1} parent=0 // pred_region
    _
  $region13: #{tpu_custom_call.1} parent=0 // pred_fallthru
    _
  // Predicated region
  $region14: #{tpu_custom_call.1} parent=0 // pred_check
    _
  $region15: #{tpu_custom_call.1} parent=0 // pred_check_branch
    %19 = sbr.rel (0) target = $region17
  $region16: #{tpu_custom_call.1} parent=0 // pred_region
    _
  $region17: #{tpu_custom_call.1} parent=0 // pred_fallthru
    _
  // Predicated region
  $region18: #{tpu_custom_call.1} parent=0 // pred_check
    _
  $region19: #{tpu_custom_call.1} parent=0 // pred_check_branch
    %21 = sbr.rel (0) target = $region21
  $region20: #{tpu_custom_call.1} parent=0 // pred_region
    _
  $region21: #{tpu_custom_call.1} parent=0 // pred_fallthru
    _
  // Predicated region
  $region22: #{tpu_custom_call.1} parent=0 // pred_check
    _
  $region23: #{tpu_custom_call.1} parent=0 // pred_check_branch
    %23 = sbr.rel (0) target = $region25
  $region24: #{tpu_custom_call.1} parent=0 // pred_region
    _
  $region25: #{tpu_custom_call.1} parent=0 // pred_fallthru
    _
  // Predicated region
  $region26: #{tpu_custom_call.1} parent=0 // pred_check
    _
  $region27: #{tpu_custom_call.1} parent=0 // pred_check_branch
    %25 = sbr.rel (0) target = $region29
  $region28: #{tpu_custom_call.1} parent=0 // pred_region
    _
  $region29: #{tpu_custom_call.1} parent=0 // pred_fallthru
    _
  %v26 = vld [vmem:[%s0] sm:$0xff]
  %v27 = vld [vmem:[%s0 + $0x8] sm:$0xff]
  %v28 = vld [vmem:[%s0 + $0x10] sm:$0xff]
  %v29 = vld [vmem:[%s0 + $0x18] sm:$0xff]
  %v30 = vld [vmem:[%s0 + $0x20] sm:$0xff]
  %v31 = vld [vmem:[%s0 + $0x28] sm:$0xff]
  %v32 = vld [vmem:[%s0 + $0x30] sm:$0xff]
  %v33 = vld [vmem:[%s0 + $0x38] sm:$0xff]
  %v34 = vld [vmem:[%s0 + $0x40] sm:$0xff]
  %v35 = vld [vmem:[%s0 + $0x48] sm:$0xff]
  %v36 = vld [vmem:[%s0 + $0x50] sm:$0xff]
  %v37 = vld [vmem:[%s0 + $0x58] sm:$0xff]
  %v38 = vld [vmem:[%s0 + $0x60] sm:$0xff]
  %v39 = vld [vmem:[%s0 + $0x68] sm:$0xff]
  %v40 = vld [vmem:[%s0 + $0x70] sm:$0xff]
  %v41 = vld [vmem:[%s0 + $0x78] sm:$0xff]
  %v42 = vld [vmem:[%s0 + $0x80] sm:$0xff]
  %v43 = vld [vmem:[%s0 + $0x88] sm:$0xff]
  %v44 = vld [vmem:[%s0 + $0x90] sm:$0xff]
  %v45 = vld [vmem:[%s0 + $0x98] sm:$0xff]
  %v46 = vld [vmem:[%s0 + $0xa0] sm:$0xff]
  %v47 = vld [vmem:[%s0 + $0xa8] sm:$0xff]
  %v48 = vld [vmem:[%s0 + $0xb0] sm:$0xff]
  %v49 = vld [vmem:[%s0 + $0xb8] sm:$0xff]
  %v50 = vld [vmem:[%s0 + $0xc0] sm:$0xff]
  %v51 = vld [vmem:[%s0 + $0xc8] sm:$0xff]
  %v52 = vld [vmem:[%s0 + $0xd0] sm:$0xff]
  %v53 = vld [vmem:[%s0 + $0xd8] sm:$0xff]
  %v54 = vld [vmem:[%s0 + $0xe0] sm:$0xff]
  %v55 = vld [vmem:[%s0 + $0xe8] sm:$0xff]
  %v56 = vld [vmem:[%s0 + $0xf0] sm:$0xff]
  %v57 = vld [vmem:[%s0 + $0xf8] sm:$0xff]
  %v58 = vld [vmem:[%s1] sm:$0x3]
  %v59 = vld [vmem:[%s2] sm:$0x1]
  %v61 = vlaneseq
  %v62 = vshrl.u32 %v61, 7
  %v63 = vsub.s32 0, %v62
  %v64 = vrot.slane %v59, %v63
  %vm66 = vcmask 15360
  %v68 = vsel %vm66, %v26, 0
  %v71 = vsel %vm66, %v27, 0
  %v74 = vsel %vm66, %v28, 0
  %v77 = vsel %vm66, %v29, 0
  %v80 = vsel %vm66, %v30, 0
  %v83 = vsel %vm66, %v31, 0
  %v86 = vsel %vm66, %v32, 0
  %v89 = vsel %vm66, %v33, 0
  %v92 = vsel %vm66, %v34, 0
  %v95 = vsel %vm66, %v35, 0
  %v98 = vsel %vm66, %v36, 0
  %v101 = vsel %vm66, %v37, 0
  %v104 = vsel %vm66, %v38, 0
  %v107 = vsel %vm66, %v39, 0
  %v110 = vsel %vm66, %v40, 0
  %v113 = vsel %vm66, %v41, 0
  %v116 = vsel %vm66, %v42, 0
  %v119 = vsel %vm66, %v43, 0
  %v122 = vsel %vm66, %v44, 0
  %v125 = vsel %vm66, %v45, 0
  %v128 = vsel %vm66, %v46, 0
  %v131 = vsel %vm66, %v47, 0
  %v134 = vsel %vm66, %v48, 0
  %v137 = vsel %vm66, %v49, 0
  %v140 = vsel %vm66, %v50, 0
  %v143 = vsel %vm66, %v51, 0
  %v146 = vsel %vm66, %v52, 0
  %v149 = vsel %vm66, %v53, 0
  %v152 = vsel %vm66, %v54, 0
  %v155 = vsel %vm66, %v55, 0
  %v158 = vsel %vm66, %v56, 0
  %v161 = vsel %vm66, %v57, 0
  %vm163 = vcmask 1041408
  %v165 = vsel %vm163, %v58, 0
  %167 = vmatprep.subr.mxu0 0.0
  %168 = vmatpush1.msra.mxu0 0.0
  %169 = vmatprep.subr.mxu0 0.0
  %170 = vmatpush1.msra.mxu0 0.0
  %171 = vmatprep.subr.mxu0 0.0
  %172 = vmatpush1.msra.mxu0 0.0
  %173 = vmatprep.subr.mxu0 0.0
  %174 = vmatpush1.msra.mxu0 0.0
  %175 = vmatprep.subr.mxu0 0.0
  %176 = vmatpush1.msra.mxu0 0.0
  %177 = vmatprep.subr.mxu0 0.0
  %178 = vmatpush1.msra.mxu0 0.0
  %179 = vmatprep.subr.mxu0 0.0
  %180 = vmatpush1.msra.mxu0 0.0
  %181 = vmatprep.subr.mxu0 0.0
  %182 = vmatpush1.msra.mxu0 0.0
  %183 = vmatprep.subr.mxu0 0.0
  %184 = vmatpush1.msra.mxu0 0.0
  %185 = vmatprep.subr.mxu0 0.0
  %186 = vmatpush1.msra.mxu0 0.0
  %187 = vmatprep.subr.mxu0 0.0
  %188 = vmatpush1.msra.mxu0 0.0
  %189 = vmatprep.subr.mxu0 0.0
  %190 = vmatpush1.msra.mxu0 0.0
  %191 = vmatprep.subr.mxu0 0.0
  %192 = vmatpush1.msra.mxu0 0.0
  %193 = vmatprep.subr.mxu0 0.0
  %194 = vmatpush1.msra.mxu0 0.0
  %195 = vmatprep.subr.mxu0 0.0
  %196 = vmatpush1.msra.mxu0 0.0
  %197 = vmatprep.subr.mxu0 0.0
  %198 = vmatpush1.msra.mxu0 %v165
  %199 = vmatprep.subr.mxu0 0.0
  %200 = vmatpush2.msra.mxu0 0.0
  %201 = vmatprep.subr.mxu0 0.0
  %202 = vmatpush2.msra.mxu0 0.0
  %203 = vmatprep.subr.mxu0 0.0
  %204 = vmatpush2.msra.mxu0 0.0
  %205 = vmatprep.subr.mxu0 0.0
  %206 = vmatpush2.msra.mxu0 0.0
  %207 = vmatprep.subr.mxu0 0.0
  %208 = vmatpush2.msra.mxu0 0.0
  %209 = vmatprep.subr.mxu0 0.0
  %210 = vmatpush2.msra.mxu0 0.0
  %211 = vmatprep.subr.mxu0 0.0
  %212 = vmatpush2.msra.mxu0 0.0
  %213 = vmatprep.subr.mxu0 0.0
  %214 = vmatpush2.msra.mxu0 0.0
  %215 = vmatprep.subr.mxu0 0.0
  %216 = vmatpush2.msra.mxu0 0.0
  %217 = vmatprep.subr.mxu0 0.0
  %218 = vmatpush2.msra.mxu0 0.0
  %219 = vmatprep.subr.mxu0 0.0
  %220 = vmatpush2.msra.mxu0 0.0
  %221 = vmatprep.subr.mxu0 0.0
  %222 = vmatpush2.msra.mxu0 0.0
  %223 = vmatprep.subr.mxu0 0.0
  %224 = vmatpush2.msra.mxu0 0.0
  %225 = vmatprep.subr.mxu0 0.0
  %226 = vmatpush2.msra.mxu0 0.0
  %227 = vmatprep.subr.mxu0 0.0
  %228 = vmatpush2.msra.mxu0 0.0
  %229 = vmatprep.subr.mxu0 0.0
  %230 = vmatpush2.msra.mxu0 0.0
  %231 = vmatprep.mubr.f32.mxu0 0.0
  %232 = vmatmul.mubr.f32.gmra.mxu0 %v68
  %v233 = vpop.f32.mrf.mxu0
  %v234 = vadd.f32 %v64, %v233
  %v235 = vpop.f32.mrf.mxu0
  %236 = vmatprep.mubr.f32.mxu0 0.0
  %237 = vmatmul.mubr.f32.gmra.mxu0 %v71
  %v238 = vpop.f32.mrf.mxu0
  %v239 = vadd.f32 %v64, %v238
  %v240 = vpop.f32.mrf.mxu0
  %241 = vmatprep.mubr.f32.mxu0 0.0
  %242 = vmatmul.mubr.f32.gmra.mxu0 %v74
  %v243 = vpop.f32.mrf.mxu0
  %v244 = vadd.f32 %v64, %v243
  %v245 = vpop.f32.mrf.mxu0
  %246 = vmatprep.mubr.f32.mxu0 0.0
  %247 = vmatmul.mubr.f32.gmra.mxu0 %v77
  %v248 = vpop.f32.mrf.mxu0
  %v249 = vadd.f32 %v64, %v248
  %v250 = vpop.f32.mrf.mxu0
  %251 = vmatprep.mubr.f32.mxu0 0.0
  %252 = vmatmul.mubr.f32.gmra.mxu0 %v80
  %v253 = vpop.f32.mrf.mxu0
  %v254 = vadd.f32 %v64, %v253
  %v255 = vpop.f32.mrf.mxu0
  %256 = vmatprep.mubr.f32.mxu0 0.0
  %257 = vmatmul.mubr.f32.gmra.mxu0 %v83
  %v258 = vpop.f32.mrf.mxu0
  %v259 = vadd.f32 %v64, %v258
  %v260 = vpop.f32.mrf.mxu0
  %261 = vmatprep.mubr.f32.mxu0 0.0
  %262 = vmatmul.mubr.f32.gmra.mxu0 %v86
  %v263 = vpop.f32.mrf.mxu0
  %v264 = vadd.f32 %v64, %v263
  %v265 = vpop.f32.mrf.mxu0
  %266 = vmatprep.mubr.f32.mxu0 0.0
  %267 = vmatmul.mubr.f32.gmra.mxu0 %v89
  %v268 = vpop.f32.mrf.mxu0
  %v269 = vadd.f32 %v64, %v268
  %v270 = vpop.f32.mrf.mxu0
  %271 = vmatprep.mubr.f32.mxu0 0.0
  %272 = vmatmul.mubr.f32.gmra.mxu0 %v92
  %v273 = vpop.f32.mrf.mxu0
  %v274 = vadd.f32 %v64, %v273
  %v275 = vpop.f32.mrf.mxu0
  %276 = vmatprep.mubr.f32.mxu0 0.0
  %277 = vmatmul.mubr.f32.gmra.mxu0 %v95
  %v278 = vpop.f32.mrf.mxu0
  %v279 = vadd.f32 %v64, %v278
  %v280 = vpop.f32.mrf.mxu0
  %281 = vmatprep.mubr.f32.mxu0 0.0
  %282 = vmatmul.mubr.f32.gmra.mxu0 %v98
  %v283 = vpop.f32.mrf.mxu0
  %v284 = vadd.f32 %v64, %v283
  %v285 = vpop.f32.mrf.mxu0
  %286 = vmatprep.mubr.f32.mxu0 0.0
  %287 = vmatmul.mubr.f32.gmra.mxu0 %v101
  %v288 = vpop.f32.mrf.mxu0
  %v289 = vadd.f32 %v64, %v288
  %v290 = vpop.f32.mrf.mxu0
  %291 = vmatprep.mubr.f32.mxu0 0.0
  %292 = vmatmul.mubr.f32.gmra.mxu0 %v104
  %v293 = vpop.f32.mrf.mxu0
  %v294 = vadd.f32 %v64, %v293
  %v295 = vpop.f32.mrf.mxu0
  %296 = vmatprep.mubr.f32.mxu0 0.0
  %297 = vmatmul.mubr.f32.gmra.mxu0 %v107
  %v298 = vpop.f32.mrf.mxu0
  %v299 = vadd.f32 %v64, %v298
  %v300 = vpop.f32.mrf.mxu0
  %301 = vmatprep.mubr.f32.mxu0 0.0
  %302 = vmatmul.mubr.f32.gmra.mxu0 %v110
  %v303 = vpop.f32.mrf.mxu0
  %v304 = vadd.f32 %v64, %v303
  %v305 = vpop.f32.mrf.mxu0
  %306 = vmatprep.mubr.f32.mxu0 0.0
  %307 = vmatmul.mubr.f32.gmra.mxu0 %v113
  %v308 = vpop.f32.mrf.mxu0
  %v309 = vadd.f32 %v64, %v308
  %v310 = vpop.f32.mrf.mxu0
  %311 = vmatprep.mubr.f32.mxu0 0.0
  %312 = vmatmul.mubr.f32.gmra.mxu0 %v116
  %v313 = vpop.f32.mrf.mxu0
  %v314 = vadd.f32 %v64, %v313
  %v315 = vpop.f32.mrf.mxu0
  %316 = vmatprep.mubr.f32.mxu0 0.0
  %317 = vmatmul.mubr.f32.gmra.mxu0 %v119
  %v318 = vpop.f32.mrf.mxu0
  %v319 = vadd.f32 %v64, %v318
  %v320 = vpop.f32.mrf.mxu0
  %321 = vmatprep.mubr.f32.mxu0 0.0
  %322 = vmatmul.mubr.f32.gmra.mxu0 %v122
  %v323 = vpop.f32.mrf.mxu0
  %v324 = vadd.f32 %v64, %v323
  %v325 = vpop.f32.mrf.mxu0
  %326 = vmatprep.mubr.f32.mxu0 0.0
  %327 = vmatmul.mubr.f32.gmra.mxu0 %v125
  %v328 = vpop.f32.mrf.mxu0
  %v329 = vadd.f32 %v64, %v328
  %v330 = vpop.f32.mrf.mxu0
  %331 = vmatprep.mubr.f32.mxu0 0.0
  %332 = vmatmul.mubr.f32.gmra.mxu0 %v128
  %v333 = vpop.f32.mrf.mxu0
  %v334 = vadd.f32 %v64, %v333
  %v335 = vpop.f32.mrf.mxu0
  %336 = vmatprep.mubr.f32.mxu0 0.0
  %337 = vmatmul.mubr.f32.gmra.mxu0 %v131
  %v338 = vpop.f32.mrf.mxu0
  %v339 = vadd.f32 %v64, %v338
  %v340 = vpop.f32.mrf.mxu0
  %341 = vmatprep.mubr.f32.mxu0 0.0
  %342 = vmatmul.mubr.f32.gmra.mxu0 %v134
  %v343 = vpop.f32.mrf.mxu0
  %v344 = vadd.f32 %v64, %v343
  %v345 = vpop.f32.mrf.mxu0
  %346 = vmatprep.mubr.f32.mxu0 0.0
  %347 = vmatmul.mubr.f32.gmra.mxu0 %v137
  %v348 = vpop.f32.mrf.mxu0
  %v349 = vadd.f32 %v64, %v348
  %v350 = vpop.f32.mrf.mxu0
  %351 = vmatprep.mubr.f32.mxu0 0.0
  %352 = vmatmul.mubr.f32.gmra.mxu0 %v140
  %v353 = vpop.f32.mrf.mxu0
  %v354 = vadd.f32 %v64, %v353
  %v355 = vpop.f32.mrf.mxu0
  %356 = vmatprep.mubr.f32.mxu0 0.0
  %357 = vmatmul.mubr.f32.gmra.mxu0 %v143
  %v358 = vpop.f32.mrf.mxu0
  %v359 = vadd.f32 %v64, %v358
  %v360 = vpop.f32.mrf.mxu0
  %361 = vmatprep.mubr.f32.mxu0 0.0
  %362 = vmatmul.mubr.f32.gmra.mxu0 %v146
  %v363 = vpop.f32.mrf.mxu0
  %v364 = vadd.f32 %v64, %v363
  %v365 = vpop.f32.mrf.mxu0
  %366 = vmatprep.mubr.f32.mxu0 0.0
  %367 = vmatmul.mubr.f32.gmra.mxu0 %v149
  %v368 = vpop.f32.mrf.mxu0
  %v369 = vadd.f32 %v64, %v368
  %v370 = vpop.f32.mrf.mxu0
  %371 = vmatprep.mubr.f32.mxu0 0.0
  %372 = vmatmul.mubr.f32.gmra.mxu0 %v152
  %v373 = vpop.f32.mrf.mxu0
  %v374 = vadd.f32 %v64, %v373
  %v375 = vpop.f32.mrf.mxu0
  %376 = vmatprep.mubr.f32.mxu0 0.0
  %377 = vmatmul.mubr.f32.gmra.mxu0 %v155
  %v378 = vpop.f32.mrf.mxu0
  %v379 = vadd.f32 %v64, %v378
  %v380 = vpop.f32.mrf.mxu0
  %381 = vmatprep.mubr.f32.mxu0 0.0
  %382 = vmatmul.mubr.f32.gmra.mxu0 %v158
  %v383 = vpop.f32.mrf.mxu0
  %v384 = vadd.f32 %v64, %v383
  %v385 = vpop.f32.mrf.mxu0
  %386 = vmatprep.mubr.f32.mxu0 0.0
  %387 = vmatmul.mubr.f32.gmra.mxu0 %v161
  %v388 = vpop.f32.mrf.mxu0
  %v389 = vadd.f32 %v64, %v388
  %v390 = vpop.f32.mrf.mxu0
  %391 = vdwg.mxu0
  %v392 = vmax.f32 %v234, 0.0
  %v393 = vmax.f32 %v239, 0.0
  %v394 = vmax.f32 %v244, 0.0
  %v395 = vmax.f32 %v249, 0.0
  %v396 = vmax.f32 %v254, 0.0
  %v397 = vmax.f32 %v259, 0.0
  %v398 = vmax.f32 %v264, 0.0
  %v399 = vmax.f32 %v269, 0.0
  %v400 = vmax.f32 %v274, 0.0
  %v401 = vmax.f32 %v279, 0.0
  %v402 = vmax.f32 %v284, 0.0
  %v403 = vmax.f32 %v289, 0.0
  %v404 = vmax.f32 %v294, 0.0
  %v405 = vmax.f32 %v299, 0.0
  %v406 = vmax.f32 %v304, 0.0
  %v407 = vmax.f32 %v309, 0.0
  %v408 = vmax.f32 %v314, 0.0
  %v409 = vmax.f32 %v319, 0.0
  %v410 = vmax.f32 %v324, 0.0
  %v411 = vmax.f32 %v329, 0.0
  %v412 = vmax.f32 %v334, 0.0
  %v413 = vmax.f32 %v339, 0.0
  %v414 = vmax.f32 %v344, 0.0
  %v415 = vmax.f32 %v349, 0.0
  %v416 = vmax.f32 %v354, 0.0
  %v417 = vmax.f32 %v359, 0.0
  %v418 = vmax.f32 %v364, 0.0
  %v419 = vmax.f32 %v369, 0.0
  %v420 = vmax.f32 %v374, 0.0
  %v421 = vmax.f32 %v379, 0.0
  %v422 = vmax.f32 %v384, 0.0
  %v423 = vmax.f32 %v389, 0.0
  %v424 = vand.u32 2147483647, %v234
  %v425 = vand.u32 2147483647, %v239
  %v426 = vand.u32 2147483647, %v244
  %v427 = vand.u32 2147483647, %v249
  %v428 = vand.u32 2147483647, %v254
  %v429 = vand.u32 2147483647, %v259
  %v430 = vand.u32 2147483647, %v264
  %v431 = vand.u32 2147483647, %v269
  %v432 = vand.u32 2147483647, %v274
  %v433 = vand.u32 2147483647, %v279
  %v434 = vand.u32 2147483647, %v284
  %v435 = vand.u32 2147483647, %v289
  %v436 = vand.u32 2147483647, %v294
  %v437 = vand.u32 2147483647, %v299
  %v438 = vand.u32 2147483647, %v304
  %v439 = vand.u32 2147483647, %v309
  %v440 = vand.u32 2147483647, %v314
  %v441 = vand.u32 2147483647, %v319
  %v442 = vand.u32 2147483647, %v324
  %v443 = vand.u32 2147483647, %v329
  %v444 = vand.u32 2147483647, %v334
  %v445 = vand.u32 2147483647, %v339
  %v446 = vand.u32 2147483647, %v344
  %v447 = vand.u32 2147483647, %v349
  %v448 = vand.u32 2147483647, %v354
  %v449 = vand.u32 2147483647, %v359
  %v450 = vand.u32 2147483647, %v364
  %v451 = vand.u32 2147483647, %v369
  %v452 = vand.u32 2147483647, %v374
  %v453 = vand.u32 2147483647, %v379
  %v454 = vand.u32 2147483647, %v384
  %v455 = vand.u32 2147483647, %v389
  %v456 = vsub.f32 0.0, %v424
  %v457 = vsub.f32 0.0, %v425
  %v458 = vsub.f32 0.0, %v426
  %v459 = vsub.f32 0.0, %v427
  %v460 = vsub.f32 0.0, %v428
  %v461 = vsub.f32 0.0, %v429
  %v462 = vsub.f32 0.0, %v430
  %v463 = vsub.f32 0.0, %v431
  %v464 = vsub.f32 0.0, %v432
  %v465 = vsub.f32 0.0, %v433
  %v466 = vsub.f32 0.0, %v434
  %v467 = vsub.f32 0.0, %v435
  %v468 = vsub.f32 0.0, %v436
  %v469 = vsub.f32 0.0, %v437
  %v470 = vsub.f32 0.0, %v438
  %v471 = vsub.f32 0.0, %v439
  %v472 = vsub.f32 0.0, %v440
  %v473 = vsub.f32 0.0, %v441
  %v474 = vsub.f32 0.0, %v442
  %v475 = vsub.f32 0.0, %v443
  %v476 = vsub.f32 0.0, %v444
  %v477 = vsub.f32 0.0, %v445
  %v478 = vsub.f32 0.0, %v446
  %v479 = vsub.f32 0.0, %v447
  %v480 = vsub.f32 0.0, %v448
  %v481 = vsub.f32 0.0, %v449
  %v482 = vsub.f32 0.0, %v450
  %v483 = vsub.f32 0.0, %v451
  %v484 = vsub.f32 0.0, %v452
  %v485 = vsub.f32 0.0, %v453
  %v486 = vsub.f32 0.0, %v454
  %v487 = vsub.f32 0.0, %v455
  %v488 = vmul.f32 %v456, 1.442695
  %v489 = vpow.pop %v488
  %v490 = vmul.f32 %v457, 1.442695
  %v491 = vpow.pop %v490
  %v492 = vmul.f32 %v458, 1.442695
  %v493 = vpow.pop %v492
  %v494 = vmul.f32 %v459, 1.442695
  %v495 = vpow.pop %v494
  %v496 = vmul.f32 %v460, 1.442695
  %v497 = vpow.pop %v496
  %v498 = vmul.f32 %v461, 1.442695
  %v499 = vpow.pop %v498
  %v500 = vmul.f32 %v462, 1.442695
  %v501 = vpow.pop %v500
  %v502 = vmul.f32 %v463, 1.442695
  %v503 = vpow.pop %v502
  %v504 = vmul.f32 %v464, 1.442695
  %v505 = vpow.pop %v504
  %v506 = vmul.f32 %v465, 1.442695
  %v507 = vpow.pop %v506
  %v508 = vmul.f32 %v466, 1.442695
  %v509 = vpow.pop %v508
  %v510 = vmul.f32 %v467, 1.442695
  %v511 = vpow.pop %v510
  %v512 = vmul.f32 %v468, 1.442695
  %v513 = vpow.pop %v512
  %v514 = vmul.f32 %v469, 1.442695
  %v515 = vpow.pop %v514
  %v516 = vmul.f32 %v470, 1.442695
  %v517 = vpow.pop %v516
  %v518 = vmul.f32 %v471, 1.442695
  %v519 = vpow.pop %v518
  %v520 = vmul.f32 %v472, 1.442695
  %v521 = vpow.pop %v520
  %v522 = vmul.f32 %v473, 1.442695
  %v523 = vpow.pop %v522
  %v524 = vmul.f32 %v474, 1.442695
  %v525 = vpow.pop %v524
  %v526 = vmul.f32 %v475, 1.442695
  %v527 = vpow.pop %v526
  %v528 = vmul.f32 %v476, 1.442695
  %v529 = vpow.pop %v528
  %v530 = vmul.f32 %v477, 1.442695
  %v531 = vpow.pop %v530
  %v532 = vmul.f32 %v478, 1.442695
  %v533 = vpow.pop %v532
  %v534 = vmul.f32 %v479, 1.442695
  %v535 = vpow.pop %v534
  %v536 = vmul.f32 %v480, 1.442695
  %v537 = vpow.pop %v536
  %v538 = vmul.f32 %v481, 1.442695
  %v539 = vpow.pop %v538
  %v540 = vmul.f32 %v482, 1.442695
  %v541 = vpow.pop %v540
  %v542 = vmul.f32 %v483, 1.442695
  %v543 = vpow.pop %v542
  %v544 = vmul.f32 %v484, 1.442695
  %v545 = vpow.pop %v544
  %v546 = vmul.f32 %v485, 1.442695
  %v547 = vpow.pop %v546
  %v548 = vmul.f32 %v486, 1.442695
  %v549 = vpow.pop %v548
  %v550 = vmul.f32 %v487, 1.442695
  %v551 = vpow.pop %v550
  %v552 = vadd.f32 %v489, 1.0
  %v553 = vlog2.pop %v552
  %v554 = vmul.f32 %v553, 0.6931472
  %v555 = vmul.f32 -0.5, %v489
  %v556 = vadd.f32 %v555, 1.0
  %v557 = vmul.f32 %v556, %v489
  %v558 = vand.u32 2147483647, %v489
  %vm559 = vcmp.lt.f32.partialorder %v558, 0.0004427343
  %v560 = vsel %vm559, %v557, %v554
  %v561 = vadd.f32 %v491, 1.0
  %v562 = vlog2.pop %v561
  %v563 = vmul.f32 %v562, 0.6931472
  %v564 = vmul.f32 -0.5, %v491
  %v565 = vadd.f32 %v564, 1.0
  %v566 = vmul.f32 %v565, %v491
  %v567 = vand.u32 2147483647, %v491
  %vm568 = vcmp.lt.f32.partialorder %v567, 0.0004427343
  %v569 = vsel %vm568, %v566, %v563
  %v570 = vadd.f32 %v493, 1.0
  %v571 = vlog2.pop %v570
  %v572 = vmul.f32 %v571, 0.6931472
  %v573 = vmul.f32 -0.5, %v493
  %v574 = vadd.f32 %v573, 1.0
  %v575 = vmul.f32 %v574, %v493
  %v576 = vand.u32 2147483647, %v493
  %vm577 = vcmp.lt.f32.partialorder %v576, 0.0004427343
  %v578 = vsel %vm577, %v575, %v572
  %v579 = vadd.f32 %v495, 1.0
  %v580 = vlog2.pop %v579
  %v581 = vmul.f32 %v580, 0.6931472
  %v582 = vmul.f32 -0.5, %v495
  %v583 = vadd.f32 %v582, 1.0
  %v584 = vmul.f32 %v583, %v495
  %v585 = vand.u32 2147483647, %v495
  %vm586 = vcmp.lt.f32.partialorder %v585, 0.0004427343
  %v587 = vsel %vm586, %v584, %v581
  %v588 = vadd.f32 %v497, 1.0
  %v589 = vlog2.pop %v588
  %v590 = vmul.f32 %v589, 0.6931472
  %v591 = vmul.f32 -0.5, %v497
  %v592 = vadd.f32 %v591, 1.0
  %v593 = vmul.f32 %v592, %v497
  %v594 = vand.u32 2147483647, %v497
  %vm595 = vcmp.lt.f32.partialorder %v594, 0.0004427343
  %v596 = vsel %vm595, %v593, %v590
  %v597 = vadd.f32 %v499, 1.0
  %v598 = vlog2.pop %v597
  %v599 = vmul.f32 %v598, 0.6931472
  %v600 = vmul.f32 -0.5, %v499
  %v601 = vadd.f32 %v600, 1.0
  %v602 = vmul.f32 %v601, %v499
  %v603 = vand.u32 2147483647, %v499
  %vm604 = vcmp.lt.f32.partialorder %v603, 0.0004427343
  %v605 = vsel %vm604, %v602, %v599
  %v606 = vadd.f32 %v501, 1.0
  %v607 = vlog2.pop %v606
  %v608 = vmul.f32 %v607, 0.6931472
  %v609 = vmul.f32 -0.5, %v501
  %v610 = vadd.f32 %v609, 1.0
  %v611 = vmul.f32 %v610, %v501
  %v612 = vand.u32 2147483647, %v501
  %vm613 = vcmp.lt.f32.partialorder %v612, 0.0004427343
  %v614 = vsel %vm613, %v611, %v608
  %v615 = vadd.f32 %v503, 1.0
  %v616 = vlog2.pop %v615
  %v617 = vmul.f32 %v616, 0.6931472
  %v618 = vmul.f32 -0.5, %v503
  %v619 = vadd.f32 %v618, 1.0
  %v620 = vmul.f32 %v619, %v503
  %v621 = vand.u32 2147483647, %v503
  %vm622 = vcmp.lt.f32.partialorder %v621, 0.0004427343
  %v623 = vsel %vm622, %v620, %v617
  %v624 = vadd.f32 %v505, 1.0
  %v625 = vlog2.pop %v624
  %v626 = vmul.f32 %v625, 0.6931472
  %v627 = vmul.f32 -0.5, %v505
  %v628 = vadd.f32 %v627, 1.0
  %v629 = vmul.f32 %v628, %v505
  %v630 = vand.u32 2147483647, %v505
  %vm631 = vcmp.lt.f32.partialorder %v630, 0.0004427343
  %v632 = vsel %vm631, %v629, %v626
  %v633 = vadd.f32 %v507, 1.0
  %v634 = vlog2.pop %v633
  %v635 = vmul.f32 %v634, 0.6931472
  %v636 = vmul.f32 -0.5, %v507
  %v637 = vadd.f32 %v636, 1.0
  %v638 = vmul.f32 %v637, %v507
  %v639 = vand.u32 2147483647, %v507
  %vm640 = vcmp.lt.f32.partialorder %v639, 0.0004427343
  %v641 = vsel %vm640, %v638, %v635
  %v642 = vadd.f32 %v509, 1.0
  %v643 = vlog2.pop %v642
  %v644 = vmul.f32 %v643, 0.6931472
  %v645 = vmul.f32 -0.5, %v509
  %v646 = vadd.f32 %v645, 1.0
  %v647 = vmul.f32 %v646, %v509
  %v648 = vand.u32 2147483647, %v509
  %vm649 = vcmp.lt.f32.partialorder %v648, 0.0004427343
  %v650 = vsel %vm649, %v647, %v644
  %v651 = vadd.f32 %v511, 1.0
  %v652 = vlog2.pop %v651
  %v653 = vmul.f32 %v652, 0.6931472
  %v654 = vmul.f32 -0.5, %v511
  %v655 = vadd.f32 %v654, 1.0
  %v656 = vmul.f32 %v655, %v511
  %v657 = vand.u32 2147483647, %v511
  %vm658 = vcmp.lt.f32.partialorder %v657, 0.0004427343
  %v659 = vsel %vm658, %v656, %v653
  %v660 = vadd.f32 %v513, 1.0
  %v661 = vlog2.pop %v660
  %v662 = vmul.f32 %v661, 0.6931472
  %v663 = vmul.f32 -0.5, %v513
  %v664 = vadd.f32 %v663, 1.0
  %v665 = vmul.f32 %v664, %v513
  %v666 = vand.u32 2147483647, %v513
  %vm667 = vcmp.lt.f32.partialorder %v666, 0.0004427343
  %v668 = vsel %vm667, %v665, %v662
  %v669 = vadd.f32 %v515, 1.0
  %v670 = vlog2.pop %v669
  %v671 = vmul.f32 %v670, 0.6931472
  %v672 = vmul.f32 -0.5, %v515
  %v673 = vadd.f32 %v672, 1.0
  %v674 = vmul.f32 %v673, %v515
  %v675 = vand.u32 2147483647, %v515
  %vm676 = vcmp.lt.f32.partialorder %v675, 0.0004427343
  %v677 = vsel %vm676, %v674, %v671
  %v678 = vadd.f32 %v517, 1.0
  %v679 = vlog2.pop %v678
  %v680 = vmul.f32 %v679, 0.6931472
  %v681 = vmul.f32 -0.5, %v517
  %v682 = vadd.f32 %v681, 1.0
  %v683 = vmul.f32 %v682, %v517
  %v684 = vand.u32 2147483647, %v517
  %vm685 = vcmp.lt.f32.partialorder %v684, 0.0004427343
  %v686 = vsel %vm685, %v683, %v680
  %v687 = vadd.f32 %v519, 1.0
  %v688 = vlog2.pop %v687
  %v689 = vmul.f32 %v688, 0.6931472
  %v690 = vmul.f32 -0.5, %v519
  %v691 = vadd.f32 %v690, 1.0
  %v692 = vmul.f32 %v691, %v519
  %v693 = vand.u32 2147483647, %v519
  %vm694 = vcmp.lt.f32.partialorder %v693, 0.0004427343
  %v695 = vsel %vm694, %v692, %v689
  %v696 = vadd.f32 %v521, 1.0
  %v697 = vlog2.pop %v696
  %v698 = vmul.f32 %v697, 0.6931472
  %v699 = vmul.f32 -0.5, %v521
  %v700 = vadd.f32 %v699, 1.0
  %v701 = vmul.f32 %v700, %v521
  %v702 = vand.u32 2147483647, %v521
  %vm703 = vcmp.lt.f32.partialorder %v702, 0.0004427343
  %v704 = vsel %vm703, %v701, %v698
  %v705 = vadd.f32 %v523, 1.0
  %v706 = vlog2.pop %v705
  %v707 = vmul.f32 %v706, 0.6931472
  %v708 = vmul.f32 -0.5, %v523
  %v709 = vadd.f32 %v708, 1.0
  %v710 = vmul.f32 %v709, %v523
  %v711 = vand.u32 2147483647, %v523
  %vm712 = vcmp.lt.f32.partialorder %v711, 0.0004427343
  %v713 = vsel %vm712, %v710, %v707
  %v714 = vadd.f32 %v525, 1.0
  %v715 = vlog2.pop %v714
  %v716 = vmul.f32 %v715, 0.6931472
  %v717 = vmul.f32 -0.5, %v525
  %v718 = vadd.f32 %v717, 1.0
  %v719 = vmul.f32 %v718, %v525
  %v720 = vand.u32 2147483647, %v525
  %vm721 = vcmp.lt.f32.partialorder %v720, 0.0004427343
  %v722 = vsel %vm721, %v719, %v716
  %v723 = vadd.f32 %v527, 1.0
  %v724 = vlog2.pop %v723
  %v725 = vmul.f32 %v724, 0.6931472
  %v726 = vmul.f32 -0.5, %v527
  %v727 = vadd.f32 %v726, 1.0
  %v728 = vmul.f32 %v727, %v527
  %v729 = vand.u32 2147483647, %v527
  %vm730 = vcmp.lt.f32.partialorder %v729, 0.0004427343
  %v731 = vsel %vm730, %v728, %v725
  %v732 = vadd.f32 %v529, 1.0
  %v733 = vlog2.pop %v732
  %v734 = vmul.f32 %v733, 0.6931472
  %v735 = vmul.f32 -0.5, %v529
  %v736 = vadd.f32 %v735, 1.0
  %v737 = vmul.f32 %v736, %v529
  %v738 = vand.u32 2147483647, %v529
  %vm739 = vcmp.lt.f32.partialorder %v738, 0.0004427343
  %v740 = vsel %vm739, %v737, %v734
  %v741 = vadd.f32 %v531, 1.0
  %v742 = vlog2.pop %v741
  %v743 = vmul.f32 %v742, 0.6931472
  %v744 = vmul.f32 -0.5, %v531
  %v745 = vadd.f32 %v744, 1.0
  %v746 = vmul.f32 %v745, %v531
  %v747 = vand.u32 2147483647, %v531
  %vm748 = vcmp.lt.f32.partialorder %v747, 0.0004427343
  %v749 = vsel %vm748, %v746, %v743
  %v750 = vadd.f32 %v533, 1.0
  %v751 = vlog2.pop %v750
  %v752 = vmul.f32 %v751, 0.6931472
  %v753 = vmul.f32 -0.5, %v533
  %v754 = vadd.f32 %v753, 1.0
  %v755 = vmul.f32 %v754, %v533
  %v756 = vand.u32 2147483647, %v533
  %vm757 = vcmp.lt.f32.partialorder %v756, 0.0004427343
  %v758 = vsel %vm757, %v755, %v752
  %v759 = vadd.f32 %v535, 1.0
  %v760 = vlog2.pop %v759
  %v761 = vmul.f32 %v760, 0.6931472
  %v762 = vmul.f32 -0.5, %v535
  %v763 = vadd.f32 %v762, 1.0
  %v764 = vmul.f32 %v763, %v535
  %v765 = vand.u32 2147483647, %v535
  %vm766 = vcmp.lt.f32.partialorder %v765, 0.0004427343
  %v767 = vsel %vm766, %v764, %v761
  %v768 = vadd.f32 %v537, 1.0
  %v769 = vlog2.pop %v768
  %v770 = vmul.f32 %v769, 0.6931472
  %v771 = vmul.f32 -0.5, %v537
  %v772 = vadd.f32 %v771, 1.0
  %v773 = vmul.f32 %v772, %v537
  %v774 = vand.u32 2147483647, %v537
  %vm775 = vcmp.lt.f32.partialorder %v774, 0.0004427343
  %v776 = vsel %vm775, %v773, %v770
  %v777 = vadd.f32 %v539, 1.0
  %v778 = vlog2.pop %v777
  %v779 = vmul.f32 %v778, 0.6931472
  %v780 = vmul.f32 -0.5, %v539
  %v781 = vadd.f32 %v780, 1.0
  %v782 = vmul.f32 %v781, %v539
  %v783 = vand.u32 2147483647, %v539
  %vm784 = vcmp.lt.f32.partialorder %v783, 0.0004427343
  %v785 = vsel %vm784, %v782, %v779
  %v786 = vadd.f32 %v541, 1.0
  %v787 = vlog2.pop %v786
  %v788 = vmul.f32 %v787, 0.6931472
  %v789 = vmul.f32 -0.5, %v541
  %v790 = vadd.f32 %v789, 1.0
  %v791 = vmul.f32 %v790, %v541
  %v792 = vand.u32 2147483647, %v541
  %vm793 = vcmp.lt.f32.partialorder %v792, 0.0004427343
  %v794 = vsel %vm793, %v791, %v788
  %v795 = vadd.f32 %v543, 1.0
  %v796 = vlog2.pop %v795
  %v797 = vmul.f32 %v796, 0.6931472
  %v798 = vmul.f32 -0.5, %v543
  %v799 = vadd.f32 %v798, 1.0
  %v800 = vmul.f32 %v799, %v543
  %v801 = vand.u32 2147483647, %v543
  %vm802 = vcmp.lt.f32.partialorder %v801, 0.0004427343
  %v803 = vsel %vm802, %v800, %v797
  %v804 = vadd.f32 %v545, 1.0
  %v805 = vlog2.pop %v804
  %v806 = vmul.f32 %v805, 0.6931472
  %v807 = vmul.f32 -0.5, %v545
  %v808 = vadd.f32 %v807, 1.0
  %v809 = vmul.f32 %v808, %v545
  %v810 = vand.u32 2147483647, %v545
  %vm811 = vcmp.lt.f32.partialorder %v810, 0.0004427343
  %v812 = vsel %vm811, %v809, %v806
  %v813 = vadd.f32 %v547, 1.0
  %v814 = vlog2.pop %v813
  %v815 = vmul.f32 %v814, 0.6931472
  %v816 = vmul.f32 -0.5, %v547
  %v817 = vadd.f32 %v816, 1.0
  %v818 = vmul.f32 %v817, %v547
  %v819 = vand.u32 2147483647, %v547
  %vm820 = vcmp.lt.f32.partialorder %v819, 0.0004427343
  %v821 = vsel %vm820, %v818, %v815
  %v822 = vadd.f32 %v549, 1.0
  %v823 = vlog2.pop %v822
  %v824 = vmul.f32 %v823, 0.6931472
  %v825 = vmul.f32 -0.5, %v549
  %v826 = vadd.f32 %v825, 1.0
  %v827 = vmul.f32 %v826, %v549
  %v828 = vand.u32 2147483647, %v549
  %vm829 = vcmp.lt.f32.partialorder %v828, 0.0004427343
  %v830 = vsel %vm829, %v827, %v824
  %v831 = vadd.f32 %v551, 1.0
  %v832 = vlog2.pop %v831
  %v833 = vmul.f32 %v832, 0.6931472
  %v834 = vmul.f32 -0.5, %v551
  %v835 = vadd.f32 %v834, 1.0
  %v836 = vmul.f32 %v835, %v551
  %v837 = vand.u32 2147483647, %v551
  %vm838 = vcmp.lt.f32.partialorder %v837, 0.0004427343
  %v839 = vsel %vm838, %v836, %v833
  %v840 = vadd.f32 %v392, %v560
  %v841 = vadd.f32 %v393, %v569
  %v842 = vadd.f32 %v394, %v578
  %v843 = vadd.f32 %v395, %v587
  %v844 = vadd.f32 %v396, %v596
  %v845 = vadd.f32 %v397, %v605
  %v846 = vadd.f32 %v398, %v614
  %v847 = vadd.f32 %v399, %v623
  %v848 = vadd.f32 %v400, %v632
  %v849 = vadd.f32 %v401, %v641
  %v850 = vadd.f32 %v402, %v650
  %v851 = vadd.f32 %v403, %v659
  %v852 = vadd.f32 %v404, %v668
  %v853 = vadd.f32 %v405, %v677
  %v854 = vadd.f32 %v406, %v686
  %v855 = vadd.f32 %v407, %v695
  %v856 = vadd.f32 %v408, %v704
  %v857 = vadd.f32 %v409, %v713
  %v858 = vadd.f32 %v410, %v722
  %v859 = vadd.f32 %v411, %v731
  %v860 = vadd.f32 %v412, %v740
  %v861 = vadd.f32 %v413, %v749
  %v862 = vadd.f32 %v414, %v758
  %v863 = vadd.f32 %v415, %v767
  %v864 = vadd.f32 %v416, %v776
  %v865 = vadd.f32 %v417, %v785
  %v866 = vadd.f32 %v418, %v794
  %v867 = vadd.f32 %v419, %v803
  %v868 = vadd.f32 %v420, %v812
  %v869 = vadd.f32 %v421, %v821
  %v870 = vadd.f32 %v422, %v830
  %v871 = vadd.f32 %v423, %v839
  %v872 = vld [vmem:[%s3] sm:$0xff]
  %v873 = vld [vmem:[%s3 + $0x8] sm:$0xff]
  %v874 = vld [vmem:[%s3 + $0x10] sm:$0xff]
  %v875 = vld [vmem:[%s3 + $0x18] sm:$0xff]
  %v876 = vld [vmem:[%s4] sm:$0x1]
  %v878 = vlaneseq
  %v879 = vshrl.u32 %v878, 7
  %v880 = vsub.s32 0, %v879
  %v881 = vrot.slane %v876, %v880
  %vm883 = vcmask 261120
  %v885 = vsel %vm883, %v840, 0
  %v888 = vsel %vm883, %v841, 0
  %v891 = vsel %vm883, %v842, 0
  %v894 = vsel %vm883, %v843, 0
  %v897 = vsel %vm883, %v844, 0
  %v900 = vsel %vm883, %v845, 0
  %v903 = vsel %vm883, %v846, 0
  %v906 = vsel %vm883, %v847, 0
  %v909 = vsel %vm883, %v848, 0
  %v912 = vsel %vm883, %v849, 0
  %v915 = vsel %vm883, %v850, 0
  %v918 = vsel %vm883, %v851, 0
  %v921 = vsel %vm883, %v852, 0
  %v924 = vsel %vm883, %v853, 0
  %v927 = vsel %vm883, %v854, 0
  %v930 = vsel %vm883, %v855, 0
  %v933 = vsel %vm883, %v856, 0
  %v936 = vsel %vm883, %v857, 0
  %v939 = vsel %vm883, %v858, 0
  %v942 = vsel %vm883, %v859, 0
  %v945 = vsel %vm883, %v860, 0
  %v948 = vsel %vm883, %v861, 0
  %v951 = vsel %vm883, %v862, 0
  %v954 = vsel %vm883, %v863, 0
  %v957 = vsel %vm883, %v864, 0
  %v960 = vsel %vm883, %v865, 0
  %v963 = vsel %vm883, %v866, 0
  %v966 = vsel %vm883, %v867, 0
  %v969 = vsel %vm883, %v868, 0
  %v972 = vsel %vm883, %v869, 0
  %v975 = vsel %vm883, %v870, 0
  %v978 = vsel %vm883, %v871, 0
  %980 = vmatprep.subr.mxu0 0.0
  %981 = vmatpush1.msra.mxu0 0.0
  %982 = vmatprep.subr.mxu0 0.0
  %983 = vmatpush1.msra.mxu0 0.0
  %984 = vmatprep.subr.mxu0 0.0
  %985 = vmatpush1.msra.mxu0 0.0
  %986 = vmatprep.subr.mxu0 0.0
  %987 = vmatpush1.msra.mxu0 0.0
  %988 = vmatprep.subr.mxu0 0.0
  %989 = vmatpush1.msra.mxu0 0.0
  %990 = vmatprep.subr.mxu0 0.0
  %991 = vmatpush1.msra.mxu0 0.0
  %992 = vmatprep.subr.mxu0 0.0
  %993 = vmatpush1.msra.mxu0 0.0
  %994 = vmatprep.subr.mxu0 0.0
  %995 = vmatpush1.msra.mxu0 0.0
  %996 = vmatprep.subr.mxu0 0.0
  %997 = vmatpush1.msra.mxu0 0.0
  %998 = vmatprep.subr.mxu0 0.0
  %999 = vmatpush1.msra.mxu0 0.0
  %1000 = vmatprep.subr.mxu0 0.0
  %1001 = vmatpush1.msra.mxu0 0.0
  %1002 = vmatprep.subr.mxu0 0.0
  %1003 = vmatpush1.msra.mxu0 0.0
  %1004 = vmatprep.subr.mxu0 0.0
  %1005 = vmatpush1.msra.mxu0 %v875
  %1006 = vmatprep.subr.mxu0 0.0
  %1007 = vmatpush1.msra.mxu0 %v874
  %1008 = vmatprep.subr.mxu0 0.0
  %1009 = vmatpush1.msra.mxu0 %v873
  %1010 = vmatprep.subr.mxu0 0.0
  %1011 = vmatpush1.msra.mxu0 %v872
  %1012 = vmatprep.subr.mxu0 0.0
  %1013 = vmatpush2.msra.mxu0 0.0
  %1014 = vmatprep.subr.mxu0 0.0
  %1015 = vmatpush2.msra.mxu0 0.0
  %1016 = vmatprep.subr.mxu0 0.0
  %1017 = vmatpush2.msra.mxu0 0.0
  %1018 = vmatprep.subr.mxu0 0.0
  %1019 = vmatpush2.msra.mxu0 0.0
  %1020 = vmatprep.subr.mxu0 0.0
  %1021 = vmatpush2.msra.mxu0 0.0
  %1022 = vmatprep.subr.mxu0 0.0
  %1023 = vmatpush2.msra.mxu0 0.0
  %1024 = vmatprep.subr.mxu0 0.0
  %1025 = vmatpush2.msra.mxu0 0.0
  %1026 = vmatprep.subr.mxu0 0.0
  %1027 = vmatpush2.msra.mxu0 0.0
  %1028 = vmatprep.subr.mxu0 0.0
  %1029 = vmatpush2.msra.mxu0 0.0
  %1030 = vmatprep.subr.mxu0 0.0
  %1031 = vmatpush2.msra.mxu0 0.0
  %1032 = vmatprep.subr.mxu0 0.0
  %1033 = vmatpush2.msra.mxu0 0.0
  %1034 = vmatprep.subr.mxu0 0.0
  %1035 = vmatpush2.msra.mxu0 0.0
  %1036 = vmatprep.subr.mxu0 0.0
  %1037 = vmatpush2.msra.mxu0 0.0
  %1038 = vmatprep.subr.mxu0 0.0
  %1039 = vmatpush2.msra.mxu0 0.0
  %1040 = vmatprep.subr.mxu0 0.0
  %1041 = vmatpush2.msra.mxu0 0.0
  %1042 = vmatprep.subr.mxu0 0.0
  %1043 = vmatpush2.msra.mxu0 0.0
  %1044 = vmatprep.mubr.f32.mxu0 0.0
  %1045 = vmatmul.mubr.f32.gmra.mxu0 %v885
  %v1046 = vpop.f32.mrf.mxu0
  %v1047 = vadd.f32 %v881, %v1046
  %v1048 = vpop.f32.mrf.mxu0
  %1049 = vmatprep.mubr.f32.mxu0 0.0
  %1050 = vmatmul.mubr.f32.gmra.mxu0 %v888
  %v1051 = vpop.f32.mrf.mxu0
  %v1052 = vadd.f32 %v881, %v1051
  %v1053 = vpop.f32.mrf.mxu0
  %1054 = vmatprep.mubr.f32.mxu0 0.0
  %1055 = vmatmul.mubr.f32.gmra.mxu0 %v891
  %v1056 = vpop.f32.mrf.mxu0
  %v1057 = vadd.f32 %v881, %v1056
  %v1058 = vpop.f32.mrf.mxu0
  %1059 = vmatprep.mubr.f32.mxu0 0.0
  %1060 = vmatmul.mubr.f32.gmra.mxu0 %v894
  %v1061 = vpop.f32.mrf.mxu0
  %v1062 = vadd.f32 %v881, %v1061
  %v1063 = vpop.f32.mrf.mxu0
  %1064 = vmatprep.mubr.f32.mxu0 0.0
  %1065 = vmatmul.mubr.f32.gmra.mxu0 %v897
  %v1066 = vpop.f32.mrf.mxu0
  %v1067 = vadd.f32 %v881, %v1066
  %v1068 = vpop.f32.mrf.mxu0
  %1069 = vmatprep.mubr.f32.mxu0 0.0
  %1070 = vmatmul.mubr.f32.gmra.mxu0 %v900
  %v1071 = vpop.f32.mrf.mxu0
  %v1072 = vadd.f32 %v881, %v1071
  %v1073 = vpop.f32.mrf.mxu0
  %1074 = vmatprep.mubr.f32.mxu0 0.0
  %1075 = vmatmul.mubr.f32.gmra.mxu0 %v903
  %v1076 = vpop.f32.mrf.mxu0
  %v1077 = vadd.f32 %v881, %v1076
  %v1078 = vpop.f32.mrf.mxu0
  %1079 = vmatprep.mubr.f32.mxu0 0.0
  %1080 = vmatmul.mubr.f32.gmra.mxu0 %v906
  %v1081 = vpop.f32.mrf.mxu0
  %v1082 = vadd.f32 %v881, %v1081
  %v1083 = vpop.f32.mrf.mxu0
  %1084 = vmatprep.mubr.f32.mxu0 0.0
  %1085 = vmatmul.mubr.f32.gmra.mxu0 %v909
  %v1086 = vpop.f32.mrf.mxu0
  %v1087 = vadd.f32 %v881, %v1086
  %v1088 = vpop.f32.mrf.mxu0
  %1089 = vmatprep.mubr.f32.mxu0 0.0
  %1090 = vmatmul.mubr.f32.gmra.mxu0 %v912
  %v1091 = vpop.f32.mrf.mxu0
  %v1092 = vadd.f32 %v881, %v1091
  %v1093 = vpop.f32.mrf.mxu0
  %1094 = vmatprep.mubr.f32.mxu0 0.0
  %1095 = vmatmul.mubr.f32.gmra.mxu0 %v915
  %v1096 = vpop.f32.mrf.mxu0
  %v1097 = vadd.f32 %v881, %v1096
  %v1098 = vpop.f32.mrf.mxu0
  %1099 = vmatprep.mubr.f32.mxu0 0.0
  %1100 = vmatmul.mubr.f32.gmra.mxu0 %v918
  %v1101 = vpop.f32.mrf.mxu0
  %v1102 = vadd.f32 %v881, %v1101
  %v1103 = vpop.f32.mrf.mxu0
  %1104 = vmatprep.mubr.f32.mxu0 0.0
  %1105 = vmatmul.mubr.f32.gmra.mxu0 %v921
  %v1106 = vpop.f32.mrf.mxu0
  %v1107 = vadd.f32 %v881, %v1106
  %v1108 = vpop.f32.mrf.mxu0
  %1109 = vmatprep.mubr.f32.mxu0 0.0
  %1110 = vmatmul.mubr.f32.gmra.mxu0 %v924
  %v1111 = vpop.f32.mrf.mxu0
  %v1112 = vadd.f32 %v881, %v1111
  %v1113 = vpop.f32.mrf.mxu0
  %1114 = vmatprep.mubr.f32.mxu0 0.0
  %1115 = vmatmul.mubr.f32.gmra.mxu0 %v927
  %v1116 = vpop.f32.mrf.mxu0
  %v1117 = vadd.f32 %v881, %v1116
  %v1118 = vpop.f32.mrf.mxu0
  %1119 = vmatprep.mubr.f32.mxu0 0.0
  %1120 = vmatmul.mubr.f32.gmra.mxu0 %v930
  %v1121 = vpop.f32.mrf.mxu0
  %v1122 = vadd.f32 %v881, %v1121
  %v1123 = vpop.f32.mrf.mxu0
  %1124 = vmatprep.mubr.f32.mxu0 0.0
  %1125 = vmatmul.mubr.f32.gmra.mxu0 %v933
  %v1126 = vpop.f32.mrf.mxu0
  %v1127 = vadd.f32 %v881, %v1126
  %v1128 = vpop.f32.mrf.mxu0
  %1129 = vmatprep.mubr.f32.mxu0 0.0
  %1130 = vmatmul.mubr.f32.gmra.mxu0 %v936
  %v1131 = vpop.f32.mrf.mxu0
  %v1132 = vadd.f32 %v881, %v1131
  %v1133 = vpop.f32.mrf.mxu0
  %1134 = vmatprep.mubr.f32.mxu0 0.0
  %1135 = vmatmul.mubr.f32.gmra.mxu0 %v939
  %v1136 = vpop.f32.mrf.mxu0
  %v1137 = vadd.f32 %v881, %v1136
  %v1138 = vpop.f32.mrf.mxu0
  %1139 = vmatprep.mubr.f32.mxu0 0.0
  %1140 = vmatmul.mubr.f32.gmra.mxu0 %v942
  %v1141 = vpop.f32.mrf.mxu0
  %v1142 = vadd.f32 %v881, %v1141
  %v1143 = vpop.f32.mrf.mxu0
  %1144 = vmatprep.mubr.f32.mxu0 0.0
  %1145 = vmatmul.mubr.f32.gmra.mxu0 %v945
  %v1146 = vpop.f32.mrf.mxu0
  %v1147 = vadd.f32 %v881, %v1146
  %v1148 = vpop.f32.mrf.mxu0
  %1149 = vmatprep.mubr.f32.mxu0 0.0
  %1150 = vmatmul.mubr.f32.gmra.mxu0 %v948
  %v1151 = vpop.f32.mrf.mxu0
  %v1152 = vadd.f32 %v881, %v1151
  %v1153 = vpop.f32.mrf.mxu0
  %1154 = vmatprep.mubr.f32.mxu0 0.0
  %1155 = vmatmul.mubr.f32.gmra.mxu0 %v951
  %v1156 = vpop.f32.mrf.mxu0
  %v1157 = vadd.f32 %v881, %v1156
  %v1158 = vpop.f32.mrf.mxu0
  %1159 = vmatprep.mubr.f32.mxu0 0.0
  %1160 = vmatmul.mubr.f32.gmra.mxu0 %v954
  %v1161 = vpop.f32.mrf.mxu0
  %v1162 = vadd.f32 %v881, %v1161
  %v1163 = vpop.f32.mrf.mxu0
  %1164 = vmatprep.mubr.f32.mxu0 0.0
  %1165 = vmatmul.mubr.f32.gmra.mxu0 %v957
  %v1166 = vpop.f32.mrf.mxu0
  %v1167 = vadd.f32 %v881, %v1166
  %v1168 = vpop.f32.mrf.mxu0
  %1169 = vmatprep.mubr.f32.mxu0 0.0
  %1170 = vmatmul.mubr.f32.gmra.mxu0 %v960
  %v1171 = vpop.f32.mrf.mxu0
  %v1172 = vadd.f32 %v881, %v1171
  %v1173 = vpop.f32.mrf.mxu0
  %1174 = vmatprep.mubr.f32.mxu0 0.0
  %1175 = vmatmul.mubr.f32.gmra.mxu0 %v963
  %v1176 = vpop.f32.mrf.mxu0
  %v1177 = vadd.f32 %v881, %v1176
  %v1178 = vpop.f32.mrf.mxu0
  %1179 = vmatprep.mubr.f32.mxu0 0.0
  %1180 = vmatmul.mubr.f32.gmra.mxu0 %v966
  %v1181 = vpop.f32.mrf.mxu0
  %v1182 = vadd.f32 %v881, %v1181
  %v1183 = vpop.f32.mrf.mxu0
  %1184 = vmatprep.mubr.f32.mxu0 0.0
  %1185 = vmatmul.mubr.f32.gmra.mxu0 %v969
  %v1186 = vpop.f32.mrf.mxu0
  %v1187 = vadd.f32 %v881, %v1186
  %v1188 = vpop.f32.mrf.mxu0
  %1189 = vmatprep.mubr.f32.mxu0 0.0
  %1190 = vmatmul.mubr.f32.gmra.mxu0 %v972
  %v1191 = vpop.f32.mrf.mxu0
  %v1192 = vadd.f32 %v881, %v1191
  %v1193 = vpop.f32.mrf.mxu0
  %1194 = vmatprep.mubr.f32.mxu0 0.0
  %1195 = vmatmul.mubr.f32.gmra.mxu0 %v975
  %v1196 = vpop.f32.mrf.mxu0
  %v1197 = vadd.f32 %v881, %v1196
  %v1198 = vpop.f32.mrf.mxu0
  %1199 = vmatprep.mubr.f32.mxu0 0.0
  %1200 = vmatmul.mubr.f32.gmra.mxu0 %v978
  %v1201 = vpop.f32.mrf.mxu0
  %v1202 = vadd.f32 %v881, %v1201
  %v1203 = vpop.f32.mrf.mxu0
  %1204 = vdwg.mxu0
  %v1205 = vmax.f32 %v1047, 0.0
  %v1206 = vmax.f32 %v1052, 0.0
  %v1207 = vmax.f32 %v1057, 0.0
  %v1208 = vmax.f32 %v1062, 0.0
  %v1209 = vmax.f32 %v1067, 0.0
  %v1210 = vmax.f32 %v1072, 0.0
  %v1211 = vmax.f32 %v1077, 0.0
  %v1212 = vmax.f32 %v1082, 0.0
  %v1213 = vmax.f32 %v1087, 0.0
  %v1214 = vmax.f32 %v1092, 0.0
  %v1215 = vmax.f32 %v1097, 0.0
  %v1216 = vmax.f32 %v1102, 0.0
  %v1217 = vmax.f32 %v1107, 0.0
  %v1218 = vmax.f32 %v1112, 0.0
  %v1219 = vmax.f32 %v1117, 0.0
  %v1220 = vmax.f32 %v1122, 0.0
  %v1221 = vmax.f32 %v1127, 0.0
  %v1222 = vmax.f32 %v1132, 0.0
  %v1223 = vmax.f32 %v1137, 0.0
  %v1224 = vmax.f32 %v1142, 0.0
  %v1225 = vmax.f32 %v1147, 0.0
  %v1226 = vmax.f32 %v1152, 0.0
  %v1227 = vmax.f32 %v1157, 0.0
  %v1228 = vmax.f32 %v1162, 0.0
  %v1229 = vmax.f32 %v1167, 0.0
  %v1230 = vmax.f32 %v1172, 0.0
  %v1231 = vmax.f32 %v1177, 0.0
  %v1232 = vmax.f32 %v1182, 0.0
  %v1233 = vmax.f32 %v1187, 0.0
  %v1234 = vmax.f32 %v1192, 0.0
  %v1235 = vmax.f32 %v1197, 0.0
  %v1236 = vmax.f32 %v1202, 0.0
  %v1237 = vand.u32 2147483647, %v1047
  %v1238 = vand.u32 2147483647, %v1052
  %v1239 = vand.u32 2147483647, %v1057
  %v1240 = vand.u32 2147483647, %v1062
  %v1241 = vand.u32 2147483647, %v1067
  %v1242 = vand.u32 2147483647, %v1072
  %v1243 = vand.u32 2147483647, %v1077
  %v1244 = vand.u32 2147483647, %v1082
  %v1245 = vand.u32 2147483647, %v1087
  %v1246 = vand.u32 2147483647, %v1092
  %v1247 = vand.u32 2147483647, %v1097
  %v1248 = vand.u32 2147483647, %v1102
  %v1249 = vand.u32 2147483647, %v1107
  %v1250 = vand.u32 2147483647, %v1112
  %v1251 = vand.u32 2147483647, %v1117
  %v1252 = vand.u32 2147483647, %v1122
  %v1253 = vand.u32 2147483647, %v1127
  %v1254 = vand.u32 2147483647, %v1132
  %v1255 = vand.u32 2147483647, %v1137
  %v1256 = vand.u32 2147483647, %v1142
  %v1257 = vand.u32 2147483647, %v1147
  %v1258 = vand.u32 2147483647, %v1152
  %v1259 = vand.u32 2147483647, %v1157
  %v1260 = vand.u32 2147483647, %v1162
  %v1261 = vand.u32 2147483647, %v1167
  %v1262 = vand.u32 2147483647, %v1172
  %v1263 = vand.u32 2147483647, %v1177
  %v1264 = vand.u32 2147483647, %v1182
  %v1265 = vand.u32 2147483647, %v1187
  %v1266 = vand.u32 2147483647, %v1192
  %v1267 = vand.u32 2147483647, %v1197
  %v1268 = vand.u32 2147483647, %v1202
  %v1269 = vsub.f32 0.0, %v1237
  %v1270 = vsub.f32 0.0, %v1238
  %v1271 = vsub.f32 0.0, %v1239
  %v1272 = vsub.f32 0.0, %v1240
  %v1273 = vsub.f32 0.0, %v1241
  %v1274 = vsub.f32 0.0, %v1242
  %v1275 = vsub.f32 0.0, %v1243
  %v1276 = vsub.f32 0.0, %v1244
  %v1277 = vsub.f32 0.0, %v1245
  %v1278 = vsub.f32 0.0, %v1246
  %v1279 = vsub.f32 0.0, %v1247
  %v1280 = vsub.f32 0.0, %v1248
  %v1281 = vsub.f32 0.0, %v1249
  %v1282 = vsub.f32 0.0, %v1250
  %v1283 = vsub.f32 0.0, %v1251
  %v1284 = vsub.f32 0.0, %v1252
  %v1285 = vsub.f32 0.0, %v1253
  %v1286 = vsub.f32 0.0, %v1254
  %v1287 = vsub.f32 0.0, %v1255
  %v1288 = vsub.f32 0.0, %v1256
  %v1289 = vsub.f32 0.0, %v1257
  %v1290 = vsub.f32 0.0, %v1258
  %v1291 = vsub.f32 0.0, %v1259
  %v1292 = vsub.f32 0.0, %v1260
  %v1293 = vsub.f32 0.0, %v1261
  %v1294 = vsub.f32 0.0, %v1262
  %v1295 = vsub.f32 0.0, %v1263
  %v1296 = vsub.f32 0.0, %v1264
  %v1297 = vsub.f32 0.0, %v1265
  %v1298 = vsub.f32 0.0, %v1266
  %v1299 = vsub.f32 0.0, %v1267
  %v1300 = vsub.f32 0.0, %v1268
  %v1301 = vmul.f32 %v1269, 1.442695
  %v1302 = vpow.pop %v1301
  %v1303 = vmul.f32 %v1270, 1.442695
  %v1304 = vpow.pop %v1303
  %v1305 = vmul.f32 %v1271, 1.442695
  %v1306 = vpow.pop %v1305
  %v1307 = vmul.f32 %v1272, 1.442695
  %v1308 = vpow.pop %v1307
  %v1309 = vmul.f32 %v1273, 1.442695
  %v1310 = vpow.pop %v1309
  %v1311 = vmul.f32 %v1274, 1.442695
  %v1312 = vpow.pop %v1311
  %v1313 = vmul.f32 %v1275, 1.442695
  %v1314 = vpow.pop %v1313
  %v1315 = vmul.f32 %v1276, 1.442695
  %v1316 = vpow.pop %v1315
  %v1317 = vmul.f32 %v1277, 1.442695
  %v1318 = vpow.pop %v1317
  %v1319 = vmul.f32 %v1278, 1.442695
  %v1320 = vpow.pop %v1319
  %v1321 = vmul.f32 %v1279, 1.442695
  %v1322 = vpow.pop %v1321
  %v1323 = vmul.f32 %v1280, 1.442695
  %v1324 = vpow.pop %v1323
  %v1325 = vmul.f32 %v1281, 1.442695
  %v1326 = vpow.pop %v1325
  %v1327 = vmul.f32 %v1282, 1.442695
  %v1328 = vpow.pop %v1327
  %v1329 = vmul.f32 %v1283, 1.442695
  %v1330 = vpow.pop %v1329
  %v1331 = vmul.f32 %v1284, 1.442695
  %v1332 = vpow.pop %v1331
  %v1333 = vmul.f32 %v1285, 1.442695
  %v1334 = vpow.pop %v1333
  %v1335 = vmul.f32 %v1286, 1.442695
  %v1336 = vpow.pop %v1335
  %v1337 = vmul.f32 %v1287, 1.442695
  %v1338 = vpow.pop %v1337
  %v1339 = vmul.f32 %v1288, 1.442695
  %v1340 = vpow.pop %v1339
  %v1341 = vmul.f32 %v1289, 1.442695
  %v1342 = vpow.pop %v1341
  %v1343 = vmul.f32 %v1290, 1.442695
  %v1344 = vpow.pop %v1343
  %v1345 = vmul.f32 %v1291, 1.442695
  %v1346 = vpow.pop %v1345
  %v1347 = vmul.f32 %v1292, 1.442695
  %v1348 = vpow.pop %v1347
  %v1349 = vmul.f32 %v1293, 1.442695
  %v1350 = vpow.pop %v1349
  %v1351 = vmul.f32 %v1294, 1.442695
  %v1352 = vpow.pop %v1351
  %v1353 = vmul.f32 %v1295, 1.442695
  %v1354 = vpow.pop %v1353
  %v1355 = vmul.f32 %v1296, 1.442695
  %v1356 = vpow.pop %v1355
  %v1357 = vmul.f32 %v1297, 1.442695
  %v1358 = vpow.pop %v1357
  %v1359 = vmul.f32 %v1298, 1.442695
  %v1360 = vpow.pop %v1359
  %v1361 = vmul.f32 %v1299, 1.442695
  %v1362 = vpow.pop %v1361
  %v1363 = vmul.f32 %v1300, 1.442695
  %v1364 = vpow.pop %v1363
  %v1365 = vadd.f32 %v1302, 1.0
  %v1366 = vlog2.pop %v1365
  %v1367 = vmul.f32 %v1366, 0.6931472
  %v1368 = vmul.f32 -0.5, %v1302
  %v1369 = vadd.f32 %v1368, 1.0
  %v1370 = vmul.f32 %v1369, %v1302
  %v1371 = vand.u32 2147483647, %v1302
  %vm1372 = vcmp.lt.f32.partialorder %v1371, 0.0004427343
  %v1373 = vsel %vm1372, %v1370, %v1367
  %v1374 = vadd.f32 %v1304, 1.0
  %v1375 = vlog2.pop %v1374
  %v1376 = vmul.f32 %v1375, 0.6931472
  %v1377 = vmul.f32 -0.5, %v1304
  %v1378 = vadd.f32 %v1377, 1.0
  %v1379 = vmul.f32 %v1378, %v1304
  %v1380 = vand.u32 2147483647, %v1304
  %vm1381 = vcmp.lt.f32.partialorder %v1380, 0.0004427343
  %v1382 = vsel %vm1381, %v1379, %v1376
  %v1383 = vadd.f32 %v1306, 1.0
  %v1384 = vlog2.pop %v1383
  %v1385 = vmul.f32 %v1384, 0.6931472
  %v1386 = vmul.f32 -0.5, %v1306
  %v1387 = vadd.f32 %v1386, 1.0
  %v1388 = vmul.f32 %v1387, %v1306
  %v1389 = vand.u32 2147483647, %v1306
  %vm1390 = vcmp.lt.f32.partialorder %v1389, 0.0004427343
  %v1391 = vsel %vm1390, %v1388, %v1385
  %v1392 = vadd.f32 %v1308, 1.0
  %v1393 = vlog2.pop %v1392
  %v1394 = vmul.f32 %v1393, 0.6931472
  %v1395 = vmul.f32 -0.5, %v1308
  %v1396 = vadd.f32 %v1395, 1.0
  %v1397 = vmul.f32 %v1396, %v1308
  %v1398 = vand.u32 2147483647, %v1308
  %vm1399 = vcmp.lt.f32.partialorder %v1398, 0.0004427343
  %v1400 = vsel %vm1399, %v1397, %v1394
  %v1401 = vadd.f32 %v1310, 1.0
  %v1402 = vlog2.pop %v1401
  %v1403 = vmul.f32 %v1402, 0.6931472
  %v1404 = vmul.f32 -0.5, %v1310
  %v1405 = vadd.f32 %v1404, 1.0
  %v1406 = vmul.f32 %v1405, %v1310
  %v1407 = vand.u32 2147483647, %v1310
  %vm1408 = vcmp.lt.f32.partialorder %v1407, 0.0004427343
  %v1409 = vsel %vm1408, %v1406, %v1403
  %v1410 = vadd.f32 %v1312, 1.0
  %v1411 = vlog2.pop %v1410
  %v1412 = vmul.f32 %v1411, 0.6931472
  %v1413 = vmul.f32 -0.5, %v1312
  %v1414 = vadd.f32 %v1413, 1.0
  %v1415 = vmul.f32 %v1414, %v1312
  %v1416 = vand.u32 2147483647, %v1312
  %vm1417 = vcmp.lt.f32.partialorder %v1416, 0.0004427343
  %v1418 = vsel %vm1417, %v1415, %v1412
  %v1419 = vadd.f32 %v1314, 1.0
  %v1420 = vlog2.pop %v1419
  %v1421 = vmul.f32 %v1420, 0.6931472
  %v1422 = vmul.f32 -0.5, %v1314
  %v1423 = vadd.f32 %v1422, 1.0
  %v1424 = vmul.f32 %v1423, %v1314
  %v1425 = vand.u32 2147483647, %v1314
  %vm1426 = vcmp.lt.f32.partialorder %v1425, 0.0004427343
  %v1427 = vsel %vm1426, %v1424, %v1421
  %v1428 = vadd.f32 %v1316, 1.0
  %v1429 = vlog2.pop %v1428
  %v1430 = vmul.f32 %v1429, 0.6931472
  %v1431 = vmul.f32 -0.5, %v1316
  %v1432 = vadd.f32 %v1431, 1.0
  %v1433 = vmul.f32 %v1432, %v1316
  %v1434 = vand.u32 2147483647, %v1316
  %vm1435 = vcmp.lt.f32.partialorder %v1434, 0.0004427343
  %v1436 = vsel %vm1435, %v1433, %v1430
  %v1437 = vadd.f32 %v1318, 1.0
  %v1438 = vlog2.pop %v1437
  %v1439 = vmul.f32 %v1438, 0.6931472
  %v1440 = vmul.f32 -0.5, %v1318
  %v1441 = vadd.f32 %v1440, 1.0
  %v1442 = vmul.f32 %v1441, %v1318
  %v1443 = vand.u32 2147483647, %v1318
  %vm1444 = vcmp.lt.f32.partialorder %v1443, 0.0004427343
  %v1445 = vsel %vm1444, %v1442, %v1439
  %v1446 = vadd.f32 %v1320, 1.0
  %v1447 = vlog2.pop %v1446
  %v1448 = vmul.f32 %v1447, 0.6931472
  %v1449 = vmul.f32 -0.5, %v1320
  %v1450 = vadd.f32 %v1449, 1.0
  %v1451 = vmul.f32 %v1450, %v1320
  %v1452 = vand.u32 2147483647, %v1320
  %vm1453 = vcmp.lt.f32.partialorder %v1452, 0.0004427343
  %v1454 = vsel %vm1453, %v1451, %v1448
  %v1455 = vadd.f32 %v1322, 1.0
  %v1456 = vlog2.pop %v1455
  %v1457 = vmul.f32 %v1456, 0.6931472
  %v1458 = vmul.f32 -0.5, %v1322
  %v1459 = vadd.f32 %v1458, 1.0
  %v1460 = vmul.f32 %v1459, %v1322
  %v1461 = vand.u32 2147483647, %v1322
  %vm1462 = vcmp.lt.f32.partialorder %v1461, 0.0004427343
  %v1463 = vsel %vm1462, %v1460, %v1457
  %v1464 = vadd.f32 %v1324, 1.0
  %v1465 = vlog2.pop %v1464
  %v1466 = vmul.f32 %v1465, 0.6931472
  %v1467 = vmul.f32 -0.5, %v1324
  %v1468 = vadd.f32 %v1467, 1.0
  %v1469 = vmul.f32 %v1468, %v1324
  %v1470 = vand.u32 2147483647, %v1324
  %vm1471 = vcmp.lt.f32.partialorder %v1470, 0.0004427343
  %v1472 = vsel %vm1471, %v1469, %v1466
  %v1473 = vadd.f32 %v1326, 1.0
  %v1474 = vlog2.pop %v1473
  %v1475 = vmul.f32 %v1474, 0.6931472
  %v1476 = vmul.f32 -0.5, %v1326
  %v1477 = vadd.f32 %v1476, 1.0
  %v1478 = vmul.f32 %v1477, %v1326
  %v1479 = vand.u32 2147483647, %v1326
  %vm1480 = vcmp.lt.f32.partialorder %v1479, 0.0004427343
  %v1481 = vsel %vm1480, %v1478, %v1475
  %v1482 = vadd.f32 %v1328, 1.0
  %v1483 = vlog2.pop %v1482
  %v1484 = vmul.f32 %v1483, 0.6931472
  %v1485 = vmul.f32 -0.5, %v1328
  %v1486 = vadd.f32 %v1485, 1.0
  %v1487 = vmul.f32 %v1486, %v1328
  %v1488 = vand.u32 2147483647, %v1328
  %vm1489 = vcmp.lt.f32.partialorder %v1488, 0.0004427343
  %v1490 = vsel %vm1489, %v1487, %v1484
  %v1491 = vadd.f32 %v1330, 1.0
  %v1492 = vlog2.pop %v1491
  %v1493 = vmul.f32 %v1492, 0.6931472
  %v1494 = vmul.f32 -0.5, %v1330
  %v1495 = vadd.f32 %v1494, 1.0
  %v1496 = vmul.f32 %v1495, %v1330
  %v1497 = vand.u32 2147483647, %v1330
  %vm1498 = vcmp.lt.f32.partialorder %v1497, 0.0004427343
  %v1499 = vsel %vm1498, %v1496, %v1493
  %v1500 = vadd.f32 %v1332, 1.0
  %v1501 = vlog2.pop %v1500
  %v1502 = vmul.f32 %v1501, 0.6931472
  %v1503 = vmul.f32 -0.5, %v1332
  %v1504 = vadd.f32 %v1503, 1.0
  %v1505 = vmul.f32 %v1504, %v1332
  %v1506 = vand.u32 2147483647, %v1332
  %vm1507 = vcmp.lt.f32.partialorder %v1506, 0.0004427343
  %v1508 = vsel %vm1507, %v1505, %v1502
  %v1509 = vadd.f32 %v1334, 1.0
  %v1510 = vlog2.pop %v1509
  %v1511 = vmul.f32 %v1510, 0.6931472
  %v1512 = vmul.f32 -0.5, %v1334
  %v1513 = vadd.f32 %v1512, 1.0
  %v1514 = vmul.f32 %v1513, %v1334
  %v1515 = vand.u32 2147483647, %v1334
  %vm1516 = vcmp.lt.f32.partialorder %v1515, 0.0004427343
  %v1517 = vsel %vm1516, %v1514, %v1511
  %v1518 = vadd.f32 %v1336, 1.0
  %v1519 = vlog2.pop %v1518
  %v1520 = vmul.f32 %v1519, 0.6931472
  %v1521 = vmul.f32 -0.5, %v1336
  %v1522 = vadd.f32 %v1521, 1.0
  %v1523 = vmul.f32 %v1522, %v1336
  %v1524 = vand.u32 2147483647, %v1336
  %vm1525 = vcmp.lt.f32.partialorder %v1524, 0.0004427343
  %v1526 = vsel %vm1525, %v1523, %v1520
  %v1527 = vadd.f32 %v1338, 1.0
  %v1528 = vlog2.pop %v1527
  %v1529 = vmul.f32 %v1528, 0.6931472
  %v1530 = vmul.f32 -0.5, %v1338
  %v1531 = vadd.f32 %v1530, 1.0
  %v1532 = vmul.f32 %v1531, %v1338
  %v1533 = vand.u32 2147483647, %v1338
  %vm1534 = vcmp.lt.f32.partialorder %v1533, 0.0004427343
  %v1535 = vsel %vm1534, %v1532, %v1529
  %v1536 = vadd.f32 %v1340, 1.0
  %v1537 = vlog2.pop %v1536
  %v1538 = vmul.f32 %v1537, 0.6931472
  %v1539 = vmul.f32 -0.5, %v1340
  %v1540 = vadd.f32 %v1539, 1.0
  %v1541 = vmul.f32 %v1540, %v1340
  %v1542 = vand.u32 2147483647, %v1340
  %vm1543 = vcmp.lt.f32.partialorder %v1542, 0.0004427343
  %v1544 = vsel %vm1543, %v1541, %v1538
  %v1545 = vadd.f32 %v1342, 1.0
  %v1546 = vlog2.pop %v1545
  %v1547 = vmul.f32 %v1546, 0.6931472
  %v1548 = vmul.f32 -0.5, %v1342
  %v1549 = vadd.f32 %v1548, 1.0
  %v1550 = vmul.f32 %v1549, %v1342
  %v1551 = vand.u32 2147483647, %v1342
  %vm1552 = vcmp.lt.f32.partialorder %v1551, 0.0004427343
  %v1553 = vsel %vm1552, %v1550, %v1547
  %v1554 = vadd.f32 %v1344, 1.0
  %v1555 = vlog2.pop %v1554
  %v1556 = vmul.f32 %v1555, 0.6931472
  %v1557 = vmul.f32 -0.5, %v1344
  %v1558 = vadd.f32 %v1557, 1.0
  %v1559 = vmul.f32 %v1558, %v1344
  %v1560 = vand.u32 2147483647, %v1344
  %vm1561 = vcmp.lt.f32.partialorder %v1560, 0.0004427343
  %v1562 = vsel %vm1561, %v1559, %v1556
  %v1563 = vadd.f32 %v1346, 1.0
  %v1564 = vlog2.pop %v1563
  %v1565 = vmul.f32 %v1564, 0.6931472
  %v1566 = vmul.f32 -0.5, %v1346
  %v1567 = vadd.f32 %v1566, 1.0
  %v1568 = vmul.f32 %v1567, %v1346
  %v1569 = vand.u32 2147483647, %v1346
  %vm1570 = vcmp.lt.f32.partialorder %v1569, 0.0004427343
  %v1571 = vsel %vm1570, %v1568, %v1565
  %v1572 = vadd.f32 %v1348, 1.0
  %v1573 = vlog2.pop %v1572
  %v1574 = vmul.f32 %v1573, 0.6931472
  %v1575 = vmul.f32 -0.5, %v1348
  %v1576 = vadd.f32 %v1575, 1.0
  %v1577 = vmul.f32 %v1576, %v1348
  %v1578 = vand.u32 2147483647, %v1348
  %vm1579 = vcmp.lt.f32.partialorder %v1578, 0.0004427343
  %v1580 = vsel %vm1579, %v1577, %v1574
  %v1581 = vadd.f32 %v1350, 1.0
  %v1582 = vlog2.pop %v1581
  %v1583 = vmul.f32 %v1582, 0.6931472
  %v1584 = vmul.f32 -0.5, %v1350
  %v1585 = vadd.f32 %v1584, 1.0
  %v1586 = vmul.f32 %v1585, %v1350
  %v1587 = vand.u32 2147483647, %v1350
  %vm1588 = vcmp.lt.f32.partialorder %v1587, 0.0004427343
  %v1589 = vsel %vm1588, %v1586, %v1583
  %v1590 = vadd.f32 %v1352, 1.0
  %v1591 = vlog2.pop %v1590
  %v1592 = vmul.f32 %v1591, 0.6931472
  %v1593 = vmul.f32 -0.5, %v1352
  %v1594 = vadd.f32 %v1593, 1.0
  %v1595 = vmul.f32 %v1594, %v1352
  %v1596 = vand.u32 2147483647, %v1352
  %vm1597 = vcmp.lt.f32.partialorder %v1596, 0.0004427343
  %v1598 = vsel %vm1597, %v1595, %v1592
  %v1599 = vadd.f32 %v1354, 1.0
  %v1600 = vlog2.pop %v1599
  %v1601 = vmul.f32 %v1600, 0.6931472
  %v1602 = vmul.f32 -0.5, %v1354
  %v1603 = vadd.f32 %v1602, 1.0
  %v1604 = vmul.f32 %v1603, %v1354
  %v1605 = vand.u32 2147483647, %v1354
  %vm1606 = vcmp.lt.f32.partialorder %v1605, 0.0004427343
  %v1607 = vsel %vm1606, %v1604, %v1601
  %v1608 = vadd.f32 %v1356, 1.0
  %v1609 = vlog2.pop %v1608
  %v1610 = vmul.f32 %v1609, 0.6931472
  %v1611 = vmul.f32 -0.5, %v1356
  %v1612 = vadd.f32 %v1611, 1.0
  %v1613 = vmul.f32 %v1612, %v1356
  %v1614 = vand.u32 2147483647, %v1356
  %vm1615 = vcmp.lt.f32.partialorder %v1614, 0.0004427343
  %v1616 = vsel %vm1615, %v1613, %v1610
  %v1617 = vadd.f32 %v1358, 1.0
  %v1618 = vlog2.pop %v1617
  %v1619 = vmul.f32 %v1618, 0.6931472
  %v1620 = vmul.f32 -0.5, %v1358
  %v1621 = vadd.f32 %v1620, 1.0
  %v1622 = vmul.f32 %v1621, %v1358
  %v1623 = vand.u32 2147483647, %v1358
  %vm1624 = vcmp.lt.f32.partialorder %v1623, 0.0004427343
  %v1625 = vsel %vm1624, %v1622, %v1619
  %v1626 = vadd.f32 %v1360, 1.0
  %v1627 = vlog2.pop %v1626
  %v1628 = vmul.f32 %v1627, 0.6931472
  %v1629 = vmul.f32 -0.5, %v1360
  %v1630 = vadd.f32 %v1629, 1.0
  %v1631 = vmul.f32 %v1630, %v1360
  %v1632 = vand.u32 2147483647, %v1360
  %vm1633 = vcmp.lt.f32.partialorder %v1632, 0.0004427343
  %v1634 = vsel %vm1633, %v1631, %v1628
  %v1635 = vadd.f32 %v1362, 1.0
  %v1636 = vlog2.pop %v1635
  %v1637 = vmul.f32 %v1636, 0.6931472
  %v1638 = vmul.f32 -0.5, %v1362
  %v1639 = vadd.f32 %v1638, 1.0
  %v1640 = vmul.f32 %v1639, %v1362
  %v1641 = vand.u32 2147483647, %v1362
  %vm1642 = vcmp.lt.f32.partialorder %v1641, 0.0004427343
  %v1643 = vsel %vm1642, %v1640, %v1637
  %v1644 = vadd.f32 %v1364, 1.0
  %v1645 = vlog2.pop %v1644
  %v1646 = vmul.f32 %v1645, 0.6931472
  %v1647 = vmul.f32 -0.5, %v1364
  %v1648 = vadd.f32 %v1647, 1.0
  %v1649 = vmul.f32 %v1648, %v1364
  %v1650 = vand.u32 2147483647, %v1364
  %vm1651 = vcmp.lt.f32.partialorder %v1650, 0.0004427343
  %v1652 = vsel %vm1651, %v1649, %v1646
  %v1653 = vadd.f32 %v1205, %v1373
  %v1654 = vadd.f32 %v1206, %v1382
  %v1655 = vadd.f32 %v1207, %v1391
  %v1656 = vadd.f32 %v1208, %v1400
  %v1657 = vadd.f32 %v1209, %v1409
  %v1658 = vadd.f32 %v1210, %v1418
  %v1659 = vadd.f32 %v1211, %v1427
  %v1660 = vadd.f32 %v1212, %v1436
  %v1661 = vadd.f32 %v1213, %v1445
  %v1662 = vadd.f32 %v1214, %v1454
  %v1663 = vadd.f32 %v1215, %v1463
  %v1664 = vadd.f32 %v1216, %v1472
  %v1665 = vadd.f32 %v1217, %v1481
  %v1666 = vadd.f32 %v1218, %v1490
  %v1667 = vadd.f32 %v1219, %v1499
  %v1668 = vadd.f32 %v1220, %v1508
  %v1669 = vadd.f32 %v1221, %v1517
  %v1670 = vadd.f32 %v1222, %v1526
  %v1671 = vadd.f32 %v1223, %v1535
  %v1672 = vadd.f32 %v1224, %v1544
  %v1673 = vadd.f32 %v1225, %v1553
  %v1674 = vadd.f32 %v1226, %v1562
  %v1675 = vadd.f32 %v1227, %v1571
  %v1676 = vadd.f32 %v1228, %v1580
  %v1677 = vadd.f32 %v1229, %v1589
  %v1678 = vadd.f32 %v1230, %v1598
  %v1679 = vadd.f32 %v1231, %v1607
  %v1680 = vadd.f32 %v1232, %v1616
  %v1681 = vadd.f32 %v1233, %v1625
  %v1682 = vadd.f32 %v1234, %v1634
  %v1683 = vadd.f32 %v1235, %v1643
  %v1684 = vadd.f32 %v1236, %v1652
  %v1685 = vld [vmem:[%s5] sm:$0xff]
  %v1686 = vld [vmem:[%s5 + $0x8] sm:$0xff]
  %v1687 = vld [vmem:[%s5 + $0x10] sm:$0xff]
  %v1688 = vld [vmem:[%s5 + $0x18] sm:$0xff]
  %v1689 = vld [vmem:[%s6] sm:$0x1]
  %v1691 = vlaneseq
  %v1692 = vshrl.u32 %v1691, 7
  %v1693 = vsub.s32 0, %v1692
  %v1694 = vrot.slane %v1689, %v1693
  %v1697 = vsel %vm883, %v1653, 0
  %v1700 = vsel %vm883, %v1654, 0
  %v1703 = vsel %vm883, %v1655, 0
  %v1706 = vsel %vm883, %v1656, 0
  %v1709 = vsel %vm883, %v1657, 0
  %v1712 = vsel %vm883, %v1658, 0
  %v1715 = vsel %vm883, %v1659, 0
  %v1718 = vsel %vm883, %v1660, 0
  %v1721 = vsel %vm883, %v1661, 0
  %v1724 = vsel %vm883, %v1662, 0
  %v1727 = vsel %vm883, %v1663, 0
  %v1730 = vsel %vm883, %v1664, 0
  %v1733 = vsel %vm883, %v1665, 0
  %v1736 = vsel %vm883, %v1666, 0
  %v1739 = vsel %vm883, %v1667, 0
  %v1742 = vsel %vm883, %v1668, 0
  %v1745 = vsel %vm883, %v1669, 0
  %v1748 = vsel %vm883, %v1670, 0
  %v1751 = vsel %vm883, %v1671, 0
  %v1754 = vsel %vm883, %v1672, 0
  %v1757 = vsel %vm883, %v1673, 0
  %v1760 = vsel %vm883, %v1674, 0
  %v1763 = vsel %vm883, %v1675, 0
  %v1766 = vsel %vm883, %v1676, 0
  %v1769 = vsel %vm883, %v1677, 0
  %v1772 = vsel %vm883, %v1678, 0
  %v1775 = vsel %vm883, %v1679, 0
  %v1778 = vsel %vm883, %v1680, 0
  %v1781 = vsel %vm883, %v1681, 0
  %v1784 = vsel %vm883, %v1682, 0
  %v1787 = vsel %vm883, %v1683, 0
  %v1790 = vsel %vm883, %v1684, 0
  %1792 = vmatprep.subr.mxu0 0.0
  %1793 = vmatpush1.msra.mxu0 0.0
  %1794 = vmatprep.subr.mxu0 0.0
  %1795 = vmatpush1.msra.mxu0 0.0
  %1796 = vmatprep.subr.mxu0 0.0
  %1797 = vmatpush1.msra.mxu0 0.0
  %1798 = vmatprep.subr.mxu0 0.0
  %1799 = vmatpush1.msra.mxu0 0.0
  %1800 = vmatprep.subr.mxu0 0.0
  %1801 = vmatpush1.msra.mxu0 0.0
  %1802 = vmatprep.subr.mxu0 0.0
  %1803 = vmatpush1.msra.mxu0 0.0
  %1804 = vmatprep.subr.mxu0 0.0
  %1805 = vmatpush1.msra.mxu0 0.0
  %1806 = vmatprep.subr.mxu0 0.0
  %1807 = vmatpush1.msra.mxu0 0.0
  %1808 = vmatprep.subr.mxu0 0.0
  %1809 = vmatpush1.msra.mxu0 0.0
  %1810 = vmatprep.subr.mxu0 0.0
  %1811 = vmatpush1.msra.mxu0 0.0
  %1812 = vmatprep.subr.mxu0 0.0
  %1813 = vmatpush1.msra.mxu0 0.0
  %1814 = vmatprep.subr.mxu0 0.0
  %1815 = vmatpush1.msra.mxu0 0.0
  %1816 = vmatprep.subr.mxu0 0.0
  %1817 = vmatpush1.msra.mxu0 %v1688
  %1818 = vmatprep.subr.mxu0 0.0
  %1819 = vmatpush1.msra.mxu0 %v1687
  %1820 = vmatprep.subr.mxu0 0.0
  %1821 = vmatpush1.msra.mxu0 %v1686
  %1822 = vmatprep.subr.mxu0 0.0
  %1823 = vmatpush1.msra.mxu0 %v1685
  %1824 = vmatprep.subr.mxu0 0.0
  %1825 = vmatpush2.msra.mxu0 0.0
  %1826 = vmatprep.subr.mxu0 0.0
  %1827 = vmatpush2.msra.mxu0 0.0
  %1828 = vmatprep.subr.mxu0 0.0
  %1829 = vmatpush2.msra.mxu0 0.0
  %1830 = vmatprep.subr.mxu0 0.0
  %1831 = vmatpush2.msra.mxu0 0.0
  %1832 = vmatprep.subr.mxu0 0.0
  %1833 = vmatpush2.msra.mxu0 0.0
  %1834 = vmatprep.subr.mxu0 0.0
  %1835 = vmatpush2.msra.mxu0 0.0
  %1836 = vmatprep.subr.mxu0 0.0
  %1837 = vmatpush2.msra.mxu0 0.0
  %1838 = vmatprep.subr.mxu0 0.0
  %1839 = vmatpush2.msra.mxu0 0.0
  %1840 = vmatprep.subr.mxu0 0.0
  %1841 = vmatpush2.msra.mxu0 0.0
  %1842 = vmatprep.subr.mxu0 0.0
  %1843 = vmatpush2.msra.mxu0 0.0
  %1844 = vmatprep.subr.mxu0 0.0
  %1845 = vmatpush2.msra.mxu0 0.0
  %1846 = vmatprep.subr.mxu0 0.0
  %1847 = vmatpush2.msra.mxu0 0.0
  %1848 = vmatprep.subr.mxu0 0.0
  %1849 = vmatpush2.msra.mxu0 0.0
  %1850 = vmatprep.subr.mxu0 0.0
  %1851 = vmatpush2.msra.mxu0 0.0
  %1852 = vmatprep.subr.mxu0 0.0
  %1853 = vmatpush2.msra.mxu0 0.0
  %1854 = vmatprep.subr.mxu0 0.0
  %1855 = vmatpush2.msra.mxu0 0.0
  %1856 = vmatprep.mubr.f32.mxu0 0.0
  %1857 = vmatmul.mubr.f32.gmra.mxu0 %v1697
  %v1858 = vpop.f32.mrf.mxu0
  %v1859 = vadd.f32 %v1694, %v1858
  %v1860 = vpop.f32.mrf.mxu0
  %1861 = vmatprep.mubr.f32.mxu0 0.0
  %1862 = vmatmul.mubr.f32.gmra.mxu0 %v1700
  %v1863 = vpop.f32.mrf.mxu0
  %v1864 = vadd.f32 %v1694, %v1863
  %v1865 = vpop.f32.mrf.mxu0
  %1866 = vmatprep.mubr.f32.mxu0 0.0
  %1867 = vmatmul.mubr.f32.gmra.mxu0 %v1703
  %v1868 = vpop.f32.mrf.mxu0
  %v1869 = vadd.f32 %v1694, %v1868
  %v1870 = vpop.f32.mrf.mxu0
  %1871 = vmatprep.mubr.f32.mxu0 0.0
  %1872 = vmatmul.mubr.f32.gmra.mxu0 %v1706
  %v1873 = vpop.f32.mrf.mxu0
  %v1874 = vadd.f32 %v1694, %v1873
  %v1875 = vpop.f32.mrf.mxu0
  %1876 = vmatprep.mubr.f32.mxu0 0.0
  %1877 = vmatmul.mubr.f32.gmra.mxu0 %v1709
  %v1878 = vpop.f32.mrf.mxu0
  %v1879 = vadd.f32 %v1694, %v1878
  %v1880 = vpop.f32.mrf.mxu0
  %1881 = vmatprep.mubr.f32.mxu0 0.0
  %1882 = vmatmul.mubr.f32.gmra.mxu0 %v1712
  %v1883 = vpop.f32.mrf.mxu0
  %v1884 = vadd.f32 %v1694, %v1883
  %v1885 = vpop.f32.mrf.mxu0
  %1886 = vmatprep.mubr.f32.mxu0 0.0
  %1887 = vmatmul.mubr.f32.gmra.mxu0 %v1715
  %v1888 = vpop.f32.mrf.mxu0
  %v1889 = vadd.f32 %v1694, %v1888
  %v1890 = vpop.f32.mrf.mxu0
  %1891 = vmatprep.mubr.f32.mxu0 0.0
  %1892 = vmatmul.mubr.f32.gmra.mxu0 %v1718
  %v1893 = vpop.f32.mrf.mxu0
  %v1894 = vadd.f32 %v1694, %v1893
  %v1895 = vpop.f32.mrf.mxu0
  %1896 = vmatprep.mubr.f32.mxu0 0.0
  %1897 = vmatmul.mubr.f32.gmra.mxu0 %v1721
  %v1898 = vpop.f32.mrf.mxu0
  %v1899 = vadd.f32 %v1694, %v1898
  %v1900 = vpop.f32.mrf.mxu0
  %1901 = vmatprep.mubr.f32.mxu0 0.0
  %1902 = vmatmul.mubr.f32.gmra.mxu0 %v1724
  %v1903 = vpop.f32.mrf.mxu0
  %v1904 = vadd.f32 %v1694, %v1903
  %v1905 = vpop.f32.mrf.mxu0
  %1906 = vmatprep.mubr.f32.mxu0 0.0
  %1907 = vmatmul.mubr.f32.gmra.mxu0 %v1727
  %v1908 = vpop.f32.mrf.mxu0
  %v1909 = vadd.f32 %v1694, %v1908
  %v1910 = vpop.f32.mrf.mxu0
  %1911 = vmatprep.mubr.f32.mxu0 0.0
  %1912 = vmatmul.mubr.f32.gmra.mxu0 %v1730
  %v1913 = vpop.f32.mrf.mxu0
  %v1914 = vadd.f32 %v1694, %v1913
  %v1915 = vpop.f32.mrf.mxu0
  %1916 = vmatprep.mubr.f32.mxu0 0.0
  %1917 = vmatmul.mubr.f32.gmra.mxu0 %v1733
  %v1918 = vpop.f32.mrf.mxu0
  %v1919 = vadd.f32 %v1694, %v1918
  %v1920 = vpop.f32.mrf.mxu0
  %1921 = vmatprep.mubr.f32.mxu0 0.0
  %1922 = vmatmul.mubr.f32.gmra.mxu0 %v1736
  %v1923 = vpop.f32.mrf.mxu0
  %v1924 = vadd.f32 %v1694, %v1923
  %v1925 = vpop.f32.mrf.mxu0
  %1926 = vmatprep.mubr.f32.mxu0 0.0
  %1927 = vmatmul.mubr.f32.gmra.mxu0 %v1739
  %v1928 = vpop.f32.mrf.mxu0
  %v1929 = vadd.f32 %v1694, %v1928
  %v1930 = vpop.f32.mrf.mxu0
  %1931 = vmatprep.mubr.f32.mxu0 0.0
  %1932 = vmatmul.mubr.f32.gmra.mxu0 %v1742
  %v1933 = vpop.f32.mrf.mxu0
  %v1934 = vadd.f32 %v1694, %v1933
  %v1935 = vpop.f32.mrf.mxu0
  %1936 = vmatprep.mubr.f32.mxu0 0.0
  %1937 = vmatmul.mubr.f32.gmra.mxu0 %v1745
  %v1938 = vpop.f32.mrf.mxu0
  %v1939 = vadd.f32 %v1694, %v1938
  %v1940 = vpop.f32.mrf.mxu0
  %1941 = vmatprep.mubr.f32.mxu0 0.0
  %1942 = vmatmul.mubr.f32.gmra.mxu0 %v1748
  %v1943 = vpop.f32.mrf.mxu0
  %v1944 = vadd.f32 %v1694, %v1943
  %v1945 = vpop.f32.mrf.mxu0
  %1946 = vmatprep.mubr.f32.mxu0 0.0
  %1947 = vmatmul.mubr.f32.gmra.mxu0 %v1751
  %v1948 = vpop.f32.mrf.mxu0
  %v1949 = vadd.f32 %v1694, %v1948
  %v1950 = vpop.f32.mrf.mxu0
  %1951 = vmatprep.mubr.f32.mxu0 0.0
  %1952 = vmatmul.mubr.f32.gmra.mxu0 %v1754
  %v1953 = vpop.f32.mrf.mxu0
  %v1954 = vadd.f32 %v1694, %v1953
  %v1955 = vpop.f32.mrf.mxu0
  %1956 = vmatprep.mubr.f32.mxu0 0.0
  %1957 = vmatmul.mubr.f32.gmra.mxu0 %v1757
  %v1958 = vpop.f32.mrf.mxu0
  %v1959 = vadd.f32 %v1694, %v1958
  %v1960 = vpop.f32.mrf.mxu0
  %1961 = vmatprep.mubr.f32.mxu0 0.0
  %1962 = vmatmul.mubr.f32.gmra.mxu0 %v1760
  %v1963 = vpop.f32.mrf.mxu0
  %v1964 = vadd.f32 %v1694, %v1963
  %v1965 = vpop.f32.mrf.mxu0
  %1966 = vmatprep.mubr.f32.mxu0 0.0
  %1967 = vmatmul.mubr.f32.gmra.mxu0 %v1763
  %v1968 = vpop.f32.mrf.mxu0
  %v1969 = vadd.f32 %v1694, %v1968
  %v1970 = vpop.f32.mrf.mxu0
  %1971 = vmatprep.mubr.f32.mxu0 0.0
  %1972 = vmatmul.mubr.f32.gmra.mxu0 %v1766
  %v1973 = vpop.f32.mrf.mxu0
  %v1974 = vadd.f32 %v1694, %v1973
  %v1975 = vpop.f32.mrf.mxu0
  %1976 = vmatprep.mubr.f32.mxu0 0.0
  %1977 = vmatmul.mubr.f32.gmra.mxu0 %v1769
  %v1978 = vpop.f32.mrf.mxu0
  %v1979 = vadd.f32 %v1694, %v1978
  %v1980 = vpop.f32.mrf.mxu0
  %1981 = vmatprep.mubr.f32.mxu0 0.0
  %1982 = vmatmul.mubr.f32.gmra.mxu0 %v1772
  %v1983 = vpop.f32.mrf.mxu0
  %v1984 = vadd.f32 %v1694, %v1983
  %v1985 = vpop.f32.mrf.mxu0
  %1986 = vmatprep.mubr.f32.mxu0 0.0
  %1987 = vmatmul.mubr.f32.gmra.mxu0 %v1775
  %v1988 = vpop.f32.mrf.mxu0
  %v1989 = vadd.f32 %v1694, %v1988
  %v1990 = vpop.f32.mrf.mxu0
  %1991 = vmatprep.mubr.f32.mxu0 0.0
  %1992 = vmatmul.mubr.f32.gmra.mxu0 %v1778
  %v1993 = vpop.f32.mrf.mxu0
  %v1994 = vadd.f32 %v1694, %v1993
  %v1995 = vpop.f32.mrf.mxu0
  %1996 = vmatprep.mubr.f32.mxu0 0.0
  %1997 = vmatmul.mubr.f32.gmra.mxu0 %v1781
  %v1998 = vpop.f32.mrf.mxu0
  %v1999 = vadd.f32 %v1694, %v1998
  %v2000 = vpop.f32.mrf.mxu0
  %2001 = vmatprep.mubr.f32.mxu0 0.0
  %2002 = vmatmul.mubr.f32.gmra.mxu0 %v1784
  %v2003 = vpop.f32.mrf.mxu0
  %v2004 = vadd.f32 %v1694, %v2003
  %v2005 = vpop.f32.mrf.mxu0
  %2006 = vmatprep.mubr.f32.mxu0 0.0
  %2007 = vmatmul.mubr.f32.gmra.mxu0 %v1787
  %v2008 = vpop.f32.mrf.mxu0
  %v2009 = vadd.f32 %v1694, %v2008
  %v2010 = vpop.f32.mrf.mxu0
  %2011 = vmatprep.mubr.f32.mxu0 0.0
  %2012 = vmatmul.mubr.f32.gmra.mxu0 %v1790
  %v2013 = vpop.f32.mrf.mxu0
  %v2014 = vadd.f32 %v1694, %v2013
  %v2015 = vpop.f32.mrf.mxu0
  %2016 = vdwg.mxu0
  %2017 = vst.msk [vmem:[%s7] sm:$0xff] %vm66, %v1859
  %2018 = vst.msk [vmem:[%s7 + $0x8] sm:$0xff] %vm66, %v1864
  %2019 = vst.msk [vmem:[%s7 + $0x10] sm:$0xff] %vm66, %v1869
  %2020 = vst.msk [vmem:[%s7 + $0x18] sm:$0xff] %vm66, %v1874
  %2021 = vst.msk [vmem:[%s7 + $0x20] sm:$0xff] %vm66, %v1879
  %2022 = vst.msk [vmem:[%s7 + $0x28] sm:$0xff] %vm66, %v1884
  %2023 = vst.msk [vmem:[%s7 + $0x30] sm:$0xff] %vm66, %v1889
  %2024 = vst.msk [vmem:[%s7 + $0x38] sm:$0xff] %vm66, %v1894
  %2025 = vst.msk [vmem:[%s7 + $0x40] sm:$0xff] %vm66, %v1899
  %2026 = vst.msk [vmem:[%s7 + $0x48] sm:$0xff] %vm66, %v1904
  %2027 = vst.msk [vmem:[%s7 + $0x50] sm:$0xff] %vm66, %v1909
  %2028 = vst.msk [vmem:[%s7 + $0x58] sm:$0xff] %vm66, %v1914
  %2029 = vst.msk [vmem:[%s7 + $0x60] sm:$0xff] %vm66, %v1919
  %2030 = vst.msk [vmem:[%s7 + $0x68] sm:$0xff] %vm66, %v1924
  %2031 = vst.msk [vmem:[%s7 + $0x70] sm:$0xff] %vm66, %v1929
  %2032 = vst.msk [vmem:[%s7 + $0x78] sm:$0xff] %vm66, %v1934
  %2033 = vst.msk [vmem:[%s7 + $0x80] sm:$0xff] %vm66, %v1939
  %2034 = vst.msk [vmem:[%s7 + $0x88] sm:$0xff] %vm66, %v1944
  %2035 = vst.msk [vmem:[%s7 + $0x90] sm:$0xff] %vm66, %v1949
  %2036 = vst.msk [vmem:[%s7 + $0x98] sm:$0xff] %vm66, %v1954
  %2037 = vst.msk [vmem:[%s7 + $0xa0] sm:$0xff] %vm66, %v1959
  %2038 = vst.msk [vmem:[%s7 + $0xa8] sm:$0xff] %vm66, %v1964
  %2039 = vst.msk [vmem:[%s7 + $0xb0] sm:$0xff] %vm66, %v1969
  %2040 = vst.msk [vmem:[%s7 + $0xb8] sm:$0xff] %vm66, %v1974
  %2041 = vst.msk [vmem:[%s7 + $0xc0] sm:$0xff] %vm66, %v1979
  %2042 = vst.msk [vmem:[%s7 + $0xc8] sm:$0xff] %vm66, %v1984
  %2043 = vst.msk [vmem:[%s7 + $0xd0] sm:$0xff] %vm66, %v1989
  %2044 = vst.msk [vmem:[%s7 + $0xd8] sm:$0xff] %vm66, %v1994
  %2045 = vst.msk [vmem:[%s7 + $0xe0] sm:$0xff] %vm66, %v1999
  %2046 = vst.msk [vmem:[%s7 + $0xe8] sm:$0xff] %vm66, %v2004
  %2047 = vst.msk [vmem:[%s7 + $0xf0] sm:$0xff] %vm66, %v2009
  %2048 = vst.msk [vmem:[%s7 + $0xf8] sm:$0xff] %vm66, %v2014
  // Predicated region
  $region30: #{tpu_custom_call.1} parent=0 // pred_check
    _
  $region31: #{tpu_custom_call.1} parent=0 // pred_check_branch
    %2050 = sbr.rel (0) target = $region33
  $region32: #{tpu_custom_call.1} parent=0 // pred_region
    _
  $region33: #{tpu_custom_call.1} parent=0 // pred_fallthru
    _
  // Predicated region
  $region34: #{tpu_custom_call.1} parent=0 // pred_check
    _
  $region35: #{tpu_custom_call.1} parent=0 // pred_check_branch
    %2052 = sbr.rel (0) target = $region37
  $region36: #{tpu_custom_call.1} parent=0 // pred_region
    _
  $region37: #{tpu_custom_call.1} parent=0 // pred_fallthru
    _

</llo_original>
